<compile_context>
chip_gen: v7x
topology: tpu7x:2x2x1
jax: 0.10.0
libtpu: 0.0.40
codegen_flags: <defaults>
</compile_context>

<pallas_src>
import numpy as np
import jax
import jax.numpy as jnp
from jax.experimental import pallas as pl
from jax.experimental.pallas import tpu as pltpu


# ------------------------------ Pallas kernel -------------------------------- #

def _build_elan_kernel(*, W, M, cn, n):
    """Fused ELAN kernel for one image, channel-major (C, M=H*W) layout."""

    def _act(z, aux):
        # aux: (C, 2) f32 columns = [scale, bias] (folded eval BatchNorm)
        z = z * aux[:, 0:1] + aux[:, 1:2]
        # SiLU: divide routed to the EUP via approx reciprocal
        return z * pl.reciprocal(1.0 + jnp.exp(-z), approx=True)

    def kernel(x_ref, w12_ref, aux12_ref, wm_ref, auxm_ref, w3_ref, aux3_ref,
               tapmask_ref, o_ref):
        x = x_ref[0]                                              # (c1, M) bf16

        # cv1 / cv2 : 1x1 conv == (cn, c1) @ (c1, M) matmul, fused BN + SiLU
        y1 = _act(jnp.dot(w12_ref[0], x, preferred_element_type=jnp.float32),
                  aux12_ref[0])
        y2 = _act(jnp.dot(w12_ref[1], x, preferred_element_type=jnp.float32),
                  aux12_ref[1])

        # hoist the 9 per-tap boundary masks once (reused by every layer)
        tap_mask = [tapmask_ref[t:t + 1, :] for t in range(9)]    # each (1, M)

        feats = [y1, y2]
        cur = y2
        for layer in range(n):                      # n is static -> unrolled
            # in-register im2col: 9 lane-rolled copies, out-of-image taps zeroed
            taps = []
            for tap in range(9):
                dy, dx = tap // 3 - 1, tap % 3 - 1
                shift = dy * W + dx                 # source offset along lanes
                v = cur if shift == 0 else pltpu.roll(cur, (-shift) % M, axis=1)
                if tap != 4:                        # center tap needs no mask
                    v = v * tap_mask[tap]
                taps.append(v)
            slab = jnp.concatenate(taps, axis=0).astype(jnp.bfloat16)  # (9cn, M)
            # one K = 9*cn matmul per 3x3 layer (channel mask folded into wm)
            z = jnp.dot(wm_ref[layer], slab, preferred_element_type=jnp.float32)
            cur = _act(z, auxm_ref[layer])
            feats.append(cur)

        # cv3: single K = (n+2)*cn matmul over the concatenated features
        # (channel mask + connection scaling already folded into w3 columns)
        allfeat = jnp.concatenate(feats, axis=0).astype(jnp.bfloat16)  # (c_, M)
        out = _act(jnp.dot(w3_ref[...], allfeat,
                           preferred_element_type=jnp.float32),
                   aux3_ref[...])
        o_ref[0] = out.astype(o_ref.dtype)          # (c2, M): lane-dense stores

    return kernel


# --------------------------- Pallas ELAN forward ----------------------------- #

def elan_forward_pallas(x_nchw, params, gamma=None, connection=None):
    """Mirrors ELAN_Search.forward(x, args={'gamma':..., 'connection':...})."""
    N, c1, H, W = x_nchw.shape
    M = H * W
    cn = params['cv1']['w'].shape[0]
    n = len(params['m'])
    c2, c_ = params['cv3']['w'].shape

    # channel search mask & connection weights (as in the PyTorch forward)
    if gamma is not None:
        mask = jnp.sum(params['channel_masks'] * gamma[:, None], axis=0)   # (cn,)
    else:
        mask = jnp.ones((cn,), jnp.float32)
    if connection is not None:
        conn = jnp.flip(jnp.asarray(connection, jnp.float32), axis=0)      # (n,)
    else:
        conn = jnp.ones((n,), jnp.float32)

    # channel-major input: NCHW -> (N, c1, H*W) is a pure reshape, no transpose
    x = x_nchw.reshape(N, c1, M).astype(jnp.bfloat16)

    # cv1 / cv2 weights + folded-BN aux (scale, bias)
    w12 = jnp.stack([params['cv1']['w'], params['cv2']['w']]).astype(jnp.bfloat16)
    aux12 = jnp.stack([
        jnp.stack([params['cv1']['scale'], params['cv1']['bias']], axis=-1),
        jnp.stack([params['cv2']['scale'], params['cv2']['bias']], axis=-1),
    ])                                                             # (2, cn, 2)

    # 3x3 conv weights as (cn, 9*cn); the per-input-channel search mask is
    # folded into the weight columns so the kernel never multiplies by mask.
    wm = jnp.stack([(p['w'] * mask[None, None, :]).reshape(cn, 9 * cn)
                    for p in params['m']]).astype(jnp.bfloat16)    # (n, cn, 9cn)
    auxm = jnp.stack([jnp.stack([p['scale'], p['bias']], axis=-1)
                      for p in params['m']])                       # (n, cn, 2)

    # cv3: fold the per-channel mask of every stored feature + connection
    # weights into the weight columns (replaces concat-scaling in the kernel).
    col_scale = jnp.concatenate([mask, mask] +
                                [mask * conn[i] for i in range(n)])   # (c_,)
    w3 = (params['cv3']['w'] * col_scale[None, :]).astype(jnp.bfloat16)  # (c2, c_)
    aux3 = jnp.stack([params['cv3']['scale'], params['cv3']['bias']], axis=-1)

    # exact (integer-math) boundary masks for the 9 conv taps, host-precomputed
    hh, ww = np.meshgrid(np.arange(H), np.arange(W), indexing='ij')
    tm = np.zeros((9, M), np.float32)
    for tap in range(9):
        dy, dx = tap // 3 - 1, tap % 3 - 1
        valid = (hh + dy >= 0) & (hh + dy < H) & (ww + dx >= 0) & (ww + dx < W)
        tm[tap] = valid.reshape(-1).astype(np.float32)
    tapmask = jnp.asarray(tm)

    kernel = _build_elan_kernel(W=W, M=M, cn=cn, n=n)

    out = pl.pallas_call(
        kernel,
        out_shape=jax.ShapeDtypeStruct((N, c2, M), jnp.float32),
        grid_spec=pltpu.PrefetchScalarGridSpec(
            num_scalar_prefetch=0,
            grid=(N,),                      # one image per step; "parallel"
            in_specs=[
                pl.BlockSpec((1, c1, M), lambda i: (i, 0, 0)),
                pl.BlockSpec((2, cn, c1), lambda i: (0, 0, 0)),
                pl.BlockSpec((2, cn, 2), lambda i: (0, 0, 0)),
                pl.BlockSpec((n, cn, 9 * cn), lambda i: (0, 0, 0)),
                pl.BlockSpec((n, cn, 2), lambda i: (0, 0, 0)),
                pl.BlockSpec((c2, c_), lambda i: (0, 0)),
                pl.BlockSpec((c2, 2), lambda i: (0, 0)),
                pl.BlockSpec((9, M), lambda i: (0, 0)),
            ],
            out_specs=pl.BlockSpec((1, c2, M), lambda i: (i, 0, 0)),
        ),
        compiler_params=pltpu.CompilerParams(
            dimension_semantics=("parallel",),
            vmem_limit_bytes=64 * 1024 * 1024),
    )(x, w12, aux12, wm, auxm, w3, aux3, tapmask)

    return out.reshape(N, c2, H, W)        # pure reshape back to NCHW


# ------------------------- plain-JAX reference path -------------------------- #

def _ref_conv(xnhwc, p, mask_vec):
    hp = jax.lax.Precision.HIGHEST
    if p['k'] == 1:
        z = jnp.einsum('nhwc,dc->nhwd', xnhwc, p['w'], precision=hp)
    else:
        cout, _, cin = p['w'].shape
        w_hwio = jnp.transpose(p['w'].reshape(cout, 3, 3, cin), (1, 2, 3, 0))
        z = jax.lax.conv_general_dilated(
            xnhwc, w_hwio, window_strides=(1, 1), padding='SAME',
            dimension_numbers=('NHWC', 'HWIO', 'NHWC'), precision=hp)
    z = z * p['scale'] + p['bias']
    z = z * jax.nn.sigmoid(z)
    return z * mask_vec


def elan_forward_ref(x_nchw, params, gamma=None, connection=None):
    """Faithful (un-fused) f32 translation of the PyTorch forward, for checking."""
    x = jnp.transpose(x_nchw, (0, 2, 3, 1))
    cn = params['cv1']['w'].shape[0]
    n = len(params['m'])
    c2 = params['cv3']['w'].shape[0]
    if gamma is not None:
        mask = jnp.sum(params['channel_masks'] * gamma[:, None], axis=0)
    else:
        mask = jnp.ones((cn,), jnp.float32)
    if connection is not None:
        conn = jnp.flip(jnp.asarray(connection, jnp.float32), axis=0)
    else:
        conn = jnp.ones((n,), jnp.float32)
    y1 = _ref_conv(x, params['cv1'], mask)
    y2 = _ref_conv(x, params['cv2'], mask)
    out = y2
    feats = [y1, y2]
    for i in range(n):
        out = _ref_conv(out, params['m'][i], mask)
        feats.append(out * conn[i])
    cat = jnp.concatenate(feats, axis=-1)          # == torch.cat(dim=1) in NCHW
    y = _ref_conv(cat, params['cv3'], jnp.ones((c2,), jnp.float32))
    return jnp.transpose(y, (0, 3, 1, 2))


# ------------------------- deterministic parameters -------------------------- #

def make_conv_params(key, cin, cout, k):
    kw, kg, kb, km, kv = jax.random.split(key, 5)
    w = jax.random.normal(kw, (cout, cin, k, k), jnp.float32) * 0.1   # Conv2d weight
    gamma = jax.random.uniform(kg, (cout,), jnp.float32, minval=0.5, maxval=1.5)
    beta = jax.random.normal(kb, (cout,), jnp.float32) * 0.1
    mean = jax.random.normal(km, (cout,), jnp.float32) * 0.1
    var = jax.random.uniform(kv, (cout,), jnp.float32, minval=0.5, maxval=1.5)
    eps = 1e-5
    s = gamma / jnp.sqrt(var + eps)                 # fold BN (eval) -> scale/bias
    b = beta - mean * s
    if k == 1:
        wk = w[:, :, 0, 0]                                             # (cout, cin)
    else:
        wk = jnp.transpose(w, (0, 2, 3, 1)).reshape(cout, k * k, cin)  # (cout, 9, cin)
    return {'k': k, 'w': wk, 'scale': s, 'bias': b}


def init_elan_params(key, c1, c2, base_cn, connection_space, gamma_space):
    n = len(connection_space)
    cn = int(np.max(gamma_space) * base_cn)
    c_ = (n + 2) * cn
    channel_values = (np.array(gamma_space) * base_cn).astype(np.int32)
    masks = np.zeros((len(gamma_space), int(channel_values.max())), np.float32)
    for i, nc in enumerate(channel_values):
        masks[i, :int(nc)] = 1.0
    keys = jax.random.split(key, 3 + n)
    return {
        'channel_masks': jnp.asarray(masks),
        'cv1': make_conv_params(keys[0], c1, cn, 1),
        'cv2': make_conv_params(keys[1], c1, cn, 1),
        'cv3': make_conv_params(keys[2], c_, c2, 1),
        'm': [make_conv_params(keys[3 + i], cn, cn, 3) for i in range(n)],
    }


# ----------------------------------- main ------------------------------------ #

if __name__ == "__main__":
    key = jax.random.PRNGKey(0)
    kx, kp = jax.random.split(key)

    c1, c2, base_cn = 4, 8, 8
    connection_space = [-1, -2, -3, -4]          # -> n = 4 inner 3x3 convs
    gamma_space = [0.25, 0.5, 1.0]               # -> cn = 8, c_ = 48

    x = jax.random.normal(kx, (2, c1, 16, 16), jnp.float32)
    params = init_elan_params(kp, c1, c2, base_cn, connection_space, gamma_space)

    # args = {'gamma': [...], 'connection': [...]} path of the PyTorch forward
    gamma = jnp.asarray([1.0 / 3, 1.0 / 3, 1.0 / 3], jnp.float32)
    connection = jnp.asarray([1.0, 0.0, 1.0, 1.0], jnp.float32)

    out = jax.block_until_ready(
        elan_forward_pallas(x, params, gamma=gamma, connection=connection))
    ref = jax.block_until_ready(
        elan_forward_ref(x, params, gamma=gamma, connection=connection))

    assert out.shape == (2, c2, 16, 16), out.shape
    assert bool(jnp.all(jnp.isfinite(out)))
    max_err = float(jnp.max(jnp.abs(out - ref)))
    # bf16 matmul operands + approx-reciprocal SiLU vs f32-HIGHEST reference.
    assert max_err < 3e-2, f"mismatch vs reference: {max_err}"
    print("KERNEL_OK")
</pallas_src>

<mosaic_0001>
module attributes {stable_mosaic.version = 11 : i64} {
  func.func @kernel(%arg0: i32, %arg1: memref<1x4x256xbf16, #tpu.memory_space<vmem>>, %arg2: memref<2x8x4xbf16, #tpu.memory_space<vmem>>, %arg3: memref<2x8x2xf32, #tpu.memory_space<vmem>>, %arg4: memref<4x8x72xbf16, #tpu.memory_space<vmem>>, %arg5: memref<4x8x2xf32, #tpu.memory_space<vmem>>, %arg6: memref<8x48xbf16, #tpu.memory_space<vmem>>, %arg7: memref<8x2xf32, #tpu.memory_space<vmem>>, %arg8: memref<9x256xf32, #tpu.memory_space<vmem>>, %arg9: memref<1x8x256xf32, #tpu.memory_space<vmem>>) attributes {dimension_semantics = [#tpu.dimension_semantics<parallel>], iteration_bounds = array<i64: 2>, scalar_prefetch = 0 : i64, scratch_operands = 0 : i64, tpu.core_type = #tpu.core_type<tc>, window_params = [{transform_indices = @transform_0, window_bounds = array<i64: 1, 4, 256>}, {pipeline_mode = #tpu.pipeline_mode<synchronous>, transform_indices = @transform_1, window_bounds = array<i64: 2, 8, 4>}, {pipeline_mode = #tpu.pipeline_mode<synchronous>, transform_indices = @transform_2, window_bounds = array<i64: 2, 8, 2>}, {pipeline_mode = #tpu.pipeline_mode<synchronous>, transform_indices = @transform_3, window_bounds = array<i64: 4, 8, 72>}, {pipeline_mode = #tpu.pipeline_mode<synchronous>, transform_indices = @transform_4, window_bounds = array<i64: 4, 8, 2>}, {pipeline_mode = #tpu.pipeline_mode<synchronous>, transform_indices = @transform_5, window_bounds = array<i64: 8, 48>}, {pipeline_mode = #tpu.pipeline_mode<synchronous>, transform_indices = @transform_6, window_bounds = array<i64: 8, 2>}, {pipeline_mode = #tpu.pipeline_mode<synchronous>, transform_indices = @transform_7, window_bounds = array<i64: 9, 256>}, {transform_indices = @transform_8, window_bounds = array<i64: 1, 8, 256>}]} {
    %c0 = arith.constant 0 : index
    %c0_0 = arith.constant 0 : index
    %c0_1 = arith.constant 0 : index
    %0 = vector.load %arg1[%c0, %c0_0, %c0_1] : memref<1x4x256xbf16, #tpu.memory_space<vmem>>, vector<1x4x256xbf16>
    %1 = vector.shape_cast %0 : vector<1x4x256xbf16> to vector<4x256xbf16>
    %c0_2 = arith.constant 0 : index
    %c0_3 = arith.constant 0 : index
    %c0_4 = arith.constant 0 : index
    %2 = vector.load %arg2[%c0_2, %c0_3, %c0_4] : memref<2x8x4xbf16, #tpu.memory_space<vmem>>, vector<1x8x4xbf16>
    %3 = vector.shape_cast %2 : vector<1x8x4xbf16> to vector<8x4xbf16>
    %cst = arith.constant dense<0.000000e+00> : vector<8x256xf32>
    %4 = tpu.matmul %3, %1, %cst {dimension_numbers = #tpu.dot_dimension_numbers<[1], [0], [0], [1], [0, 0, 1, 1], [], []>} : vector<8x4xbf16>, vector<4x256xbf16>, vector<8x256xf32> -> vector<8x256xf32>
    %c0_5 = arith.constant 0 : index
    %c0_6 = arith.constant 0 : index
    %c0_7 = arith.constant 0 : index
    %5 = vector.load %arg3[%c0_5, %c0_6, %c0_7] : memref<2x8x2xf32, #tpu.memory_space<vmem>>, vector<1x8x2xf32>
    %6 = vector.shape_cast %5 : vector<1x8x2xf32> to vector<8x2xf32>
    %7 = vector.extract_strided_slice %6 {offsets = [0, 0], sizes = [8, 1], strides = [1, 1]} : vector<8x2xf32> to vector<8x1xf32>
    %8 = vector.broadcast %7 : vector<8x1xf32> to vector<8x256xf32>
    %9 = arith.mulf %4, %8 : vector<8x256xf32>
    %10 = vector.extract_strided_slice %6 {offsets = [0, 1], sizes = [8, 1], strides = [1, 1]} : vector<8x2xf32> to vector<8x1xf32>
    %11 = vector.broadcast %10 : vector<8x1xf32> to vector<8x256xf32>
    %12 = arith.addf %9, %11 : vector<8x256xf32>
    %cst_8 = arith.constant 0.000000e+00 : f32
    %13 = vector.broadcast %cst_8 : f32 to vector<8x256xf32>
    %14 = arith.subf %13, %12 : vector<8x256xf32>
    %15 = math.exp %14 : vector<8x256xf32>
    %cst_9 = arith.constant 1.000000e+00 : f32
    %16 = vector.broadcast %cst_9 : f32 to vector<8x256xf32>
    %17 = arith.addf %16, %15 : vector<8x256xf32>
    %18 = tpu.reciprocal %17 {approx = true} : vector<8x256xf32> -> vector<8x256xf32>
    %19 = arith.mulf %12, %18 : vector<8x256xf32>
    %c1 = arith.constant 1 : index
    %c0_10 = arith.constant 0 : index
    %c0_11 = arith.constant 0 : index
    %20 = vector.load %arg2[%c1, %c0_10, %c0_11] : memref<2x8x4xbf16, #tpu.memory_space<vmem>>, vector<1x8x4xbf16>
    %21 = vector.shape_cast %20 : vector<1x8x4xbf16> to vector<8x4xbf16>
    %cst_12 = arith.constant dense<0.000000e+00> : vector<8x256xf32>
    %22 = tpu.matmul %21, %1, %cst_12 {dimension_numbers = #tpu.dot_dimension_numbers<[1], [0], [0], [1], [0, 0, 1, 1], [], []>} : vector<8x4xbf16>, vector<4x256xbf16>, vector<8x256xf32> -> vector<8x256xf32>
    %c1_13 = arith.constant 1 : index
    %c0_14 = arith.constant 0 : index
    %c0_15 = arith.constant 0 : index
    %23 = vector.load %arg3[%c1_13, %c0_14, %c0_15] : memref<2x8x2xf32, #tpu.memory_space<vmem>>, vector<1x8x2xf32>
    %24 = vector.shape_cast %23 : vector<1x8x2xf32> to vector<8x2xf32>
    %25 = vector.extract_strided_slice %24 {offsets = [0, 0], sizes = [8, 1], strides = [1, 1]} : vector<8x2xf32> to vector<8x1xf32>
    %26 = vector.broadcast %25 : vector<8x1xf32> to vector<8x256xf32>
    %27 = arith.mulf %22, %26 : vector<8x256xf32>
    %28 = vector.extract_strided_slice %24 {offsets = [0, 1], sizes = [8, 1], strides = [1, 1]} : vector<8x2xf32> to vector<8x1xf32>
    %29 = vector.broadcast %28 : vector<8x1xf32> to vector<8x256xf32>
    %30 = arith.addf %27, %29 : vector<8x256xf32>
    %cst_16 = arith.constant 0.000000e+00 : f32
    %31 = vector.broadcast %cst_16 : f32 to vector<8x256xf32>
    %32 = arith.subf %31, %30 : vector<8x256xf32>
    %33 = math.exp %32 : vector<8x256xf32>
    %cst_17 = arith.constant 1.000000e+00 : f32
    %34 = vector.broadcast %cst_17 : f32 to vector<8x256xf32>
    %35 = arith.addf %34, %33 : vector<8x256xf32>
    %36 = tpu.reciprocal %35 {approx = true} : vector<8x256xf32> -> vector<8x256xf32>
    %37 = arith.mulf %30, %36 : vector<8x256xf32>
    %c0_18 = arith.constant 0 : index
    %c0_19 = arith.constant 0 : index
    %38 = vector.load %arg8[%c0_18, %c0_19] : memref<9x256xf32, #tpu.memory_space<vmem>>, vector<1x256xf32>
    %c1_20 = arith.constant 1 : index
    %c0_21 = arith.constant 0 : index
    %39 = vector.load %arg8[%c1_20, %c0_21] : memref<9x256xf32, #tpu.memory_space<vmem>>, vector<1x256xf32>
    %c2 = arith.constant 2 : index
    %c0_22 = arith.constant 0 : index
    %40 = vector.load %arg8[%c2, %c0_22] : memref<9x256xf32, #tpu.memory_space<vmem>>, vector<1x256xf32>
    %c3 = arith.constant 3 : index
    %c0_23 = arith.constant 0 : index
    %41 = vector.load %arg8[%c3, %c0_23] : memref<9x256xf32, #tpu.memory_space<vmem>>, vector<1x256xf32>
    %c5 = arith.constant 5 : index
    %c0_24 = arith.constant 0 : index
    %42 = vector.load %arg8[%c5, %c0_24] : memref<9x256xf32, #tpu.memory_space<vmem>>, vector<1x256xf32>
    %c6 = arith.constant 6 : index
    %c0_25 = arith.constant 0 : index
    %43 = vector.load %arg8[%c6, %c0_25] : memref<9x256xf32, #tpu.memory_space<vmem>>, vector<1x256xf32>
    %c7 = arith.constant 7 : index
    %c0_26 = arith.constant 0 : index
    %44 = vector.load %arg8[%c7, %c0_26] : memref<9x256xf32, #tpu.memory_space<vmem>>, vector<1x256xf32>
    %c8 = arith.constant 8 : index
    %c0_27 = arith.constant 0 : index
    %45 = vector.load %arg8[%c8, %c0_27] : memref<9x256xf32, #tpu.memory_space<vmem>>, vector<1x256xf32>
    %c17_i32 = arith.constant 17 : i32
    %46 = tpu.dynamic_rotate %37 by %c17_i32 dim 1 : vector<8x256xf32>, i32 -> vector<8x256xf32>
    %47 = vector.broadcast %38 : vector<1x256xf32> to vector<8x256xf32>
    %48 = arith.mulf %46, %47 : vector<8x256xf32>
    %c16_i32 = arith.constant 16 : i32
    %49 = tpu.dynamic_rotate %37 by %c16_i32 dim 1 : vector<8x256xf32>, i32 -> vector<8x256xf32>
    %50 = vector.broadcast %39 : vector<1x256xf32> to vector<8x256xf32>
    %51 = arith.mulf %49, %50 : vector<8x256xf32>
    %c15_i32 = arith.constant 15 : i32
    %52 = tpu.dynamic_rotate %37 by %c15_i32 dim 1 : vector<8x256xf32>, i32 -> vector<8x256xf32>
    %53 = vector.broadcast %40 : vector<1x256xf32> to vector<8x256xf32>
    %54 = arith.mulf %52, %53 : vector<8x256xf32>
    %c1_i32 = arith.constant 1 : i32
    %55 = tpu.dynamic_rotate %37 by %c1_i32 dim 1 : vector<8x256xf32>, i32 -> vector<8x256xf32>
    %56 = vector.broadcast %41 : vector<1x256xf32> to vector<8x256xf32>
    %57 = arith.mulf %55, %56 : vector<8x256xf32>
    %c255_i32 = arith.constant 255 : i32
    %58 = tpu.dynamic_rotate %37 by %c255_i32 dim 1 : vector<8x256xf32>, i32 -> vector<8x256xf32>
    %59 = vector.broadcast %42 : vector<1x256xf32> to vector<8x256xf32>
    %60 = arith.mulf %58, %59 : vector<8x256xf32>
    %c241_i32 = arith.constant 241 : i32
    %61 = tpu.dynamic_rotate %37 by %c241_i32 dim 1 : vector<8x256xf32>, i32 -> vector<8x256xf32>
    %62 = vector.broadcast %43 : vector<1x256xf32> to vector<8x256xf32>
    %63 = arith.mulf %61, %62 : vector<8x256xf32>
    %c240_i32 = arith.constant 240 : i32
    %64 = tpu.dynamic_rotate %37 by %c240_i32 dim 1 : vector<8x256xf32>, i32 -> vector<8x256xf32>
    %65 = vector.broadcast %44 : vector<1x256xf32> to vector<8x256xf32>
    %66 = arith.mulf %64, %65 : vector<8x256xf32>
    %c239_i32 = arith.constant 239 : i32
    %67 = tpu.dynamic_rotate %37 by %c239_i32 dim 1 : vector<8x256xf32>, i32 -> vector<8x256xf32>
    %68 = vector.broadcast %45 : vector<1x256xf32> to vector<8x256xf32>
    %69 = arith.mulf %67, %68 : vector<8x256xf32>
    %70 = tpu.concatenate %48, %51, %54, %57, %37, %60, %63, %66, %69 in 0 : vector<8x256xf32>, vector<8x256xf32>, vector<8x256xf32>, vector<8x256xf32>, vector<8x256xf32>, vector<8x256xf32>, vector<8x256xf32>, vector<8x256xf32>, vector<8x256xf32> -> vector<72x256xf32>
    %71 = arith.truncf %70 : vector<72x256xf32> to vector<72x256xbf16>
    %c0_28 = arith.constant 0 : index
    %c0_29 = arith.constant 0 : index
    %c0_30 = arith.constant 0 : index
    %72 = vector.load %arg4[%c0_28, %c0_29, %c0_30] : memref<4x8x72xbf16, #tpu.memory_space<vmem>>, vector<1x8x72xbf16>
    %73 = vector.shape_cast %72 : vector<1x8x72xbf16> to vector<8x72xbf16>
    %cst_31 = arith.constant dense<0.000000e+00> : vector<8x256xf32>
    %74 = tpu.matmul %73, %71, %cst_31 {dimension_numbers = #tpu.dot_dimension_numbers<[1], [0], [0], [1], [0, 0, 1, 1], [], []>} : vector<8x72xbf16>, vector<72x256xbf16>, vector<8x256xf32> -> vector<8x256xf32>
    %c0_32 = arith.constant 0 : index
    %c0_33 = arith.constant 0 : index
    %c0_34 = arith.constant 0 : index
    %75 = vector.load %arg5[%c0_32, %c0_33, %c0_34] : memref<4x8x2xf32, #tpu.memory_space<vmem>>, vector<1x8x2xf32>
    %76 = vector.shape_cast %75 : vector<1x8x2xf32> to vector<8x2xf32>
    %77 = vector.extract_strided_slice %76 {offsets = [0, 0], sizes = [8, 1], strides = [1, 1]} : vector<8x2xf32> to vector<8x1xf32>
    %78 = vector.broadcast %77 : vector<8x1xf32> to vector<8x256xf32>
    %79 = arith.mulf %74, %78 : vector<8x256xf32>
    %80 = vector.extract_strided_slice %76 {offsets = [0, 1], sizes = [8, 1], strides = [1, 1]} : vector<8x2xf32> to vector<8x1xf32>
    %81 = vector.broadcast %80 : vector<8x1xf32> to vector<8x256xf32>
    %82 = arith.addf %79, %81 : vector<8x256xf32>
    %cst_35 = arith.constant 0.000000e+00 : f32
    %83 = vector.broadcast %cst_35 : f32 to vector<8x256xf32>
    %84 = arith.subf %83, %82 : vector<8x256xf32>
    %85 = math.exp %84 : vector<8x256xf32>
    %cst_36 = arith.constant 1.000000e+00 : f32
    %86 = vector.broadcast %cst_36 : f32 to vector<8x256xf32>
    %87 = arith.addf %86, %85 : vector<8x256xf32>
    %88 = tpu.reciprocal %87 {approx = true} : vector<8x256xf32> -> vector<8x256xf32>
    %89 = arith.mulf %82, %88 : vector<8x256xf32>
    %c17_i32_37 = arith.constant 17 : i32
    %90 = tpu.dynamic_rotate %89 by %c17_i32_37 dim 1 : vector<8x256xf32>, i32 -> vector<8x256xf32>
    %91 = vector.broadcast %38 : vector<1x256xf32> to vector<8x256xf32>
    %92 = arith.mulf %90, %91 : vector<8x256xf32>
    %c16_i32_38 = arith.constant 16 : i32
    %93 = tpu.dynamic_rotate %89 by %c16_i32_38 dim 1 : vector<8x256xf32>, i32 -> vector<8x256xf32>
    %94 = vector.broadcast %39 : vector<1x256xf32> to vector<8x256xf32>
    %95 = arith.mulf %93, %94 : vector<8x256xf32>
    %c15_i32_39 = arith.constant 15 : i32
    %96 = tpu.dynamic_rotate %89 by %c15_i32_39 dim 1 : vector<8x256xf32>, i32 -> vector<8x256xf32>
    %97 = vector.broadcast %40 : vector<1x256xf32> to vector<8x256xf32>
    %98 = arith.mulf %96, %97 : vector<8x256xf32>
    %c1_i32_40 = arith.constant 1 : i32
    %99 = tpu.dynamic_rotate %89 by %c1_i32_40 dim 1 : vector<8x256xf32>, i32 -> vector<8x256xf32>
    %100 = vector.broadcast %41 : vector<1x256xf32> to vector<8x256xf32>
    %101 = arith.mulf %99, %100 : vector<8x256xf32>
    %c255_i32_41 = arith.constant 255 : i32
    %102 = tpu.dynamic_rotate %89 by %c255_i32_41 dim 1 : vector<8x256xf32>, i32 -> vector<8x256xf32>
    %103 = vector.broadcast %42 : vector<1x256xf32> to vector<8x256xf32>
    %104 = arith.mulf %102, %103 : vector<8x256xf32>
    %c241_i32_42 = arith.constant 241 : i32
    %105 = tpu.dynamic_rotate %89 by %c241_i32_42 dim 1 : vector<8x256xf32>, i32 -> vector<8x256xf32>
    %106 = vector.broadcast %43 : vector<1x256xf32> to vector<8x256xf32>
    %107 = arith.mulf %105, %106 : vector<8x256xf32>
    %c240_i32_43 = arith.constant 240 : i32
    %108 = tpu.dynamic_rotate %89 by %c240_i32_43 dim 1 : vector<8x256xf32>, i32 -> vector<8x256xf32>
    %109 = vector.broadcast %44 : vector<1x256xf32> to vector<8x256xf32>
    %110 = arith.mulf %108, %109 : vector<8x256xf32>
    %c239_i32_44 = arith.constant 239 : i32
    %111 = tpu.dynamic_rotate %89 by %c239_i32_44 dim 1 : vector<8x256xf32>, i32 -> vector<8x256xf32>
    %112 = vector.broadcast %45 : vector<1x256xf32> to vector<8x256xf32>
    %113 = arith.mulf %111, %112 : vector<8x256xf32>
    %114 = tpu.concatenate %92, %95, %98, %101, %89, %104, %107, %110, %113 in 0 : vector<8x256xf32>, vector<8x256xf32>, vector<8x256xf32>, vector<8x256xf32>, vector<8x256xf32>, vector<8x256xf32>, vector<8x256xf32>, vector<8x256xf32>, vector<8x256xf32> -> vector<72x256xf32>
    %115 = arith.truncf %114 : vector<72x256xf32> to vector<72x256xbf16>
    %c1_45 = arith.constant 1 : index
    %c0_46 = arith.constant 0 : index
    %c0_47 = arith.constant 0 : index
    %116 = vector.load %arg4[%c1_45, %c0_46, %c0_47] : memref<4x8x72xbf16, #tpu.memory_space<vmem>>, vector<1x8x72xbf16>
    %117 = vector.shape_cast %116 : vector<1x8x72xbf16> to vector<8x72xbf16>
    %cst_48 = arith.constant dense<0.000000e+00> : vector<8x256xf32>
    %118 = tpu.matmul %117, %115, %cst_48 {dimension_numbers = #tpu.dot_dimension_numbers<[1], [0], [0], [1], [0, 0, 1, 1], [], []>} : vector<8x72xbf16>, vector<72x256xbf16>, vector<8x256xf32> -> vector<8x256xf32>
    %c1_49 = arith.constant 1 : index
    %c0_50 = arith.constant 0 : index
    %c0_51 = arith.constant 0 : index
    %119 = vector.load %arg5[%c1_49, %c0_50, %c0_51] : memref<4x8x2xf32, #tpu.memory_space<vmem>>, vector<1x8x2xf32>
    %120 = vector.shape_cast %119 : vector<1x8x2xf32> to vector<8x2xf32>
    %121 = vector.extract_strided_slice %120 {offsets = [0, 0], sizes = [8, 1], strides = [1, 1]} : vector<8x2xf32> to vector<8x1xf32>
    %122 = vector.broadcast %121 : vector<8x1xf32> to vector<8x256xf32>
    %123 = arith.mulf %118, %122 : vector<8x256xf32>
    %124 = vector.extract_strided_slice %120 {offsets = [0, 1], sizes = [8, 1], strides = [1, 1]} : vector<8x2xf32> to vector<8x1xf32>
    %125 = vector.broadcast %124 : vector<8x1xf32> to vector<8x256xf32>
    %126 = arith.addf %123, %125 : vector<8x256xf32>
    %cst_52 = arith.constant 0.000000e+00 : f32
    %127 = vector.broadcast %cst_52 : f32 to vector<8x256xf32>
    %128 = arith.subf %127, %126 : vector<8x256xf32>
    %129 = math.exp %128 : vector<8x256xf32>
    %cst_53 = arith.constant 1.000000e+00 : f32
    %130 = vector.broadcast %cst_53 : f32 to vector<8x256xf32>
    %131 = arith.addf %130, %129 : vector<8x256xf32>
    %132 = tpu.reciprocal %131 {approx = true} : vector<8x256xf32> -> vector<8x256xf32>
    %133 = arith.mulf %126, %132 : vector<8x256xf32>
    %c17_i32_54 = arith.constant 17 : i32
    %134 = tpu.dynamic_rotate %133 by %c17_i32_54 dim 1 : vector<8x256xf32>, i32 -> vector<8x256xf32>
    %135 = vector.broadcast %38 : vector<1x256xf32> to vector<8x256xf32>
    %136 = arith.mulf %134, %135 : vector<8x256xf32>
    %c16_i32_55 = arith.constant 16 : i32
    %137 = tpu.dynamic_rotate %133 by %c16_i32_55 dim 1 : vector<8x256xf32>, i32 -> vector<8x256xf32>
    %138 = vector.broadcast %39 : vector<1x256xf32> to vector<8x256xf32>
    %139 = arith.mulf %137, %138 : vector<8x256xf32>
    %c15_i32_56 = arith.constant 15 : i32
    %140 = tpu.dynamic_rotate %133 by %c15_i32_56 dim 1 : vector<8x256xf32>, i32 -> vector<8x256xf32>
    %141 = vector.broadcast %40 : vector<1x256xf32> to vector<8x256xf32>
    %142 = arith.mulf %140, %141 : vector<8x256xf32>
    %c1_i32_57 = arith.constant 1 : i32
    %143 = tpu.dynamic_rotate %133 by %c1_i32_57 dim 1 : vector<8x256xf32>, i32 -> vector<8x256xf32>
    %144 = vector.broadcast %41 : vector<1x256xf32> to vector<8x256xf32>
    %145 = arith.mulf %143, %144 : vector<8x256xf32>
    %c255_i32_58 = arith.constant 255 : i32
    %146 = tpu.dynamic_rotate %133 by %c255_i32_58 dim 1 : vector<8x256xf32>, i32 -> vector<8x256xf32>
    %147 = vector.broadcast %42 : vector<1x256xf32> to vector<8x256xf32>
    %148 = arith.mulf %146, %147 : vector<8x256xf32>
    %c241_i32_59 = arith.constant 241 : i32
    %149 = tpu.dynamic_rotate %133 by %c241_i32_59 dim 1 : vector<8x256xf32>, i32 -> vector<8x256xf32>
    %150 = vector.broadcast %43 : vector<1x256xf32> to vector<8x256xf32>
    %151 = arith.mulf %149, %150 : vector<8x256xf32>
    %c240_i32_60 = arith.constant 240 : i32
    %152 = tpu.dynamic_rotate %133 by %c240_i32_60 dim 1 : vector<8x256xf32>, i32 -> vector<8x256xf32>
    %153 = vector.broadcast %44 : vector<1x256xf32> to vector<8x256xf32>
    %154 = arith.mulf %152, %153 : vector<8x256xf32>
    %c239_i32_61 = arith.constant 239 : i32
    %155 = tpu.dynamic_rotate %133 by %c239_i32_61 dim 1 : vector<8x256xf32>, i32 -> vector<8x256xf32>
    %156 = vector.broadcast %45 : vector<1x256xf32> to vector<8x256xf32>
    %157 = arith.mulf %155, %156 : vector<8x256xf32>
    %158 = tpu.concatenate %136, %139, %142, %145, %133, %148, %151, %154, %157 in 0 : vector<8x256xf32>, vector<8x256xf32>, vector<8x256xf32>, vector<8x256xf32>, vector<8x256xf32>, vector<8x256xf32>, vector<8x256xf32>, vector<8x256xf32>, vector<8x256xf32> -> vector<72x256xf32>
    %159 = arith.truncf %158 : vector<72x256xf32> to vector<72x256xbf16>
    %c2_62 = arith.constant 2 : index
    %c0_63 = arith.constant 0 : index
    %c0_64 = arith.constant 0 : index
    %160 = vector.load %arg4[%c2_62, %c0_63, %c0_64] : memref<4x8x72xbf16, #tpu.memory_space<vmem>>, vector<1x8x72xbf16>
    %161 = vector.shape_cast %160 : vector<1x8x72xbf16> to vector<8x72xbf16>
    %cst_65 = arith.constant dense<0.000000e+00> : vector<8x256xf32>
    %162 = tpu.matmul %161, %159, %cst_65 {dimension_numbers = #tpu.dot_dimension_numbers<[1], [0], [0], [1], [0, 0, 1, 1], [], []>} : vector<8x72xbf16>, vector<72x256xbf16>, vector<8x256xf32> -> vector<8x256xf32>
    %c2_66 = arith.constant 2 : index
    %c0_67 = arith.constant 0 : index
    %c0_68 = arith.constant 0 : index
    %163 = vector.load %arg5[%c2_66, %c0_67, %c0_68] : memref<4x8x2xf32, #tpu.memory_space<vmem>>, vector<1x8x2xf32>
    %164 = vector.shape_cast %163 : vector<1x8x2xf32> to vector<8x2xf32>
    %165 = vector.extract_strided_slice %164 {offsets = [0, 0], sizes = [8, 1], strides = [1, 1]} : vector<8x2xf32> to vector<8x1xf32>
    %166 = vector.broadcast %165 : vector<8x1xf32> to vector<8x256xf32>
    %167 = arith.mulf %162, %166 : vector<8x256xf32>
    %168 = vector.extract_strided_slice %164 {offsets = [0, 1], sizes = [8, 1], strides = [1, 1]} : vector<8x2xf32> to vector<8x1xf32>
    %169 = vector.broadcast %168 : vector<8x1xf32> to vector<8x256xf32>
    %170 = arith.addf %167, %169 : vector<8x256xf32>
    %cst_69 = arith.constant 0.000000e+00 : f32
    %171 = vector.broadcast %cst_69 : f32 to vector<8x256xf32>
    %172 = arith.subf %171, %170 : vector<8x256xf32>
    %173 = math.exp %172 : vector<8x256xf32>
    %cst_70 = arith.constant 1.000000e+00 : f32
    %174 = vector.broadcast %cst_70 : f32 to vector<8x256xf32>
    %175 = arith.addf %174, %173 : vector<8x256xf32>
    %176 = tpu.reciprocal %175 {approx = true} : vector<8x256xf32> -> vector<8x256xf32>
    %177 = arith.mulf %170, %176 : vector<8x256xf32>
    %c17_i32_71 = arith.constant 17 : i32
    %178 = tpu.dynamic_rotate %177 by %c17_i32_71 dim 1 : vector<8x256xf32>, i32 -> vector<8x256xf32>
    %179 = vector.broadcast %38 : vector<1x256xf32> to vector<8x256xf32>
    %180 = arith.mulf %178, %179 : vector<8x256xf32>
    %c16_i32_72 = arith.constant 16 : i32
    %181 = tpu.dynamic_rotate %177 by %c16_i32_72 dim 1 : vector<8x256xf32>, i32 -> vector<8x256xf32>
    %182 = vector.broadcast %39 : vector<1x256xf32> to vector<8x256xf32>
    %183 = arith.mulf %181, %182 : vector<8x256xf32>
    %c15_i32_73 = arith.constant 15 : i32
    %184 = tpu.dynamic_rotate %177 by %c15_i32_73 dim 1 : vector<8x256xf32>, i32 -> vector<8x256xf32>
    %185 = vector.broadcast %40 : vector<1x256xf32> to vector<8x256xf32>
    %186 = arith.mulf %184, %185 : vector<8x256xf32>
    %c1_i32_74 = arith.constant 1 : i32
    %187 = tpu.dynamic_rotate %177 by %c1_i32_74 dim 1 : vector<8x256xf32>, i32 -> vector<8x256xf32>
    %188 = vector.broadcast %41 : vector<1x256xf32> to vector<8x256xf32>
    %189 = arith.mulf %187, %188 : vector<8x256xf32>
    %c255_i32_75 = arith.constant 255 : i32
    %190 = tpu.dynamic_rotate %177 by %c255_i32_75 dim 1 : vector<8x256xf32>, i32 -> vector<8x256xf32>
    %191 = vector.broadcast %42 : vector<1x256xf32> to vector<8x256xf32>
    %192 = arith.mulf %190, %191 : vector<8x256xf32>
    %c241_i32_76 = arith.constant 241 : i32
    %193 = tpu.dynamic_rotate %177 by %c241_i32_76 dim 1 : vector<8x256xf32>, i32 -> vector<8x256xf32>
    %194 = vector.broadcast %43 : vector<1x256xf32> to vector<8x256xf32>
    %195 = arith.mulf %193, %194 : vector<8x256xf32>
    %c240_i32_77 = arith.constant 240 : i32
    %196 = tpu.dynamic_rotate %177 by %c240_i32_77 dim 1 : vector<8x256xf32>, i32 -> vector<8x256xf32>
    %197 = vector.broadcast %44 : vector<1x256xf32> to vector<8x256xf32>
    %198 = arith.mulf %196, %197 : vector<8x256xf32>
    %c239_i32_78 = arith.constant 239 : i32
    %199 = tpu.dynamic_rotate %177 by %c239_i32_78 dim 1 : vector<8x256xf32>, i32 -> vector<8x256xf32>
    %200 = vector.broadcast %45 : vector<1x256xf32> to vector<8x256xf32>
    %201 = arith.mulf %199, %200 : vector<8x256xf32>
    %202 = tpu.concatenate %180, %183, %186, %189, %177, %192, %195, %198, %201 in 0 : vector<8x256xf32>, vector<8x256xf32>, vector<8x256xf32>, vector<8x256xf32>, vector<8x256xf32>, vector<8x256xf32>, vector<8x256xf32>, vector<8x256xf32>, vector<8x256xf32> -> vector<72x256xf32>
    %203 = arith.truncf %202 : vector<72x256xf32> to vector<72x256xbf16>
    %c3_79 = arith.constant 3 : index
    %c0_80 = arith.constant 0 : index
    %c0_81 = arith.constant 0 : index
    %204 = vector.load %arg4[%c3_79, %c0_80, %c0_81] : memref<4x8x72xbf16, #tpu.memory_space<vmem>>, vector<1x8x72xbf16>
    %205 = vector.shape_cast %204 : vector<1x8x72xbf16> to vector<8x72xbf16>
    %cst_82 = arith.constant dense<0.000000e+00> : vector<8x256xf32>
    %206 = tpu.matmul %205, %203, %cst_82 {dimension_numbers = #tpu.dot_dimension_numbers<[1], [0], [0], [1], [0, 0, 1, 1], [], []>} : vector<8x72xbf16>, vector<72x256xbf16>, vector<8x256xf32> -> vector<8x256xf32>
    %c3_83 = arith.constant 3 : index
    %c0_84 = arith.constant 0 : index
    %c0_85 = arith.constant 0 : index
    %207 = vector.load %arg5[%c3_83, %c0_84, %c0_85] : memref<4x8x2xf32, #tpu.memory_space<vmem>>, vector<1x8x2xf32>
    %208 = vector.shape_cast %207 : vector<1x8x2xf32> to vector<8x2xf32>
    %209 = vector.extract_strided_slice %208 {offsets = [0, 0], sizes = [8, 1], strides = [1, 1]} : vector<8x2xf32> to vector<8x1xf32>
    %210 = vector.broadcast %209 : vector<8x1xf32> to vector<8x256xf32>
    %211 = arith.mulf %206, %210 : vector<8x256xf32>
    %212 = vector.extract_strided_slice %208 {offsets = [0, 1], sizes = [8, 1], strides = [1, 1]} : vector<8x2xf32> to vector<8x1xf32>
    %213 = vector.broadcast %212 : vector<8x1xf32> to vector<8x256xf32>
    %214 = arith.addf %211, %213 : vector<8x256xf32>
    %cst_86 = arith.constant 0.000000e+00 : f32
    %215 = vector.broadcast %cst_86 : f32 to vector<8x256xf32>
    %216 = arith.subf %215, %214 : vector<8x256xf32>
    %217 = math.exp %216 : vector<8x256xf32>
    %cst_87 = arith.constant 1.000000e+00 : f32
    %218 = vector.broadcast %cst_87 : f32 to vector<8x256xf32>
    %219 = arith.addf %218, %217 : vector<8x256xf32>
    %220 = tpu.reciprocal %219 {approx = true} : vector<8x256xf32> -> vector<8x256xf32>
    %221 = arith.mulf %214, %220 : vector<8x256xf32>
    %222 = tpu.concatenate %19, %37, %89, %133, %177, %221 in 0 : vector<8x256xf32>, vector<8x256xf32>, vector<8x256xf32>, vector<8x256xf32>, vector<8x256xf32>, vector<8x256xf32> -> vector<48x256xf32>
    %223 = arith.truncf %222 : vector<48x256xf32> to vector<48x256xbf16>
    %c0_88 = arith.constant 0 : index
    %c0_89 = arith.constant 0 : index
    %224 = vector.load %arg6[%c0_88, %c0_89] : memref<8x48xbf16, #tpu.memory_space<vmem>>, vector<8x48xbf16>
    %cst_90 = arith.constant dense<0.000000e+00> : vector<8x256xf32>
    %225 = tpu.matmul %224, %223, %cst_90 {dimension_numbers = #tpu.dot_dimension_numbers<[1], [0], [0], [1], [0, 0, 1, 1], [], []>} : vector<8x48xbf16>, vector<48x256xbf16>, vector<8x256xf32> -> vector<8x256xf32>
    %c0_91 = arith.constant 0 : index
    %c0_92 = arith.constant 0 : index
    %226 = vector.load %arg7[%c0_91, %c0_92] : memref<8x2xf32, #tpu.memory_space<vmem>>, vector<8x2xf32>
    %227 = vector.extract_strided_slice %226 {offsets = [0, 0], sizes = [8, 1], strides = [1, 1]} : vector<8x2xf32> to vector<8x1xf32>
    %228 = vector.broadcast %227 : vector<8x1xf32> to vector<8x256xf32>
    %229 = arith.mulf %225, %228 : vector<8x256xf32>
    %230 = vector.extract_strided_slice %226 {offsets = [0, 1], sizes = [8, 1], strides = [1, 1]} : vector<8x2xf32> to vector<8x1xf32>
    %231 = vector.broadcast %230 : vector<8x1xf32> to vector<8x256xf32>
    %232 = arith.addf %229, %231 : vector<8x256xf32>
    %cst_93 = arith.constant 0.000000e+00 : f32
    %233 = vector.broadcast %cst_93 : f32 to vector<8x256xf32>
    %234 = arith.subf %233, %232 : vector<8x256xf32>
    %235 = math.exp %234 : vector<8x256xf32>
    %cst_94 = arith.constant 1.000000e+00 : f32
    %236 = vector.broadcast %cst_94 : f32 to vector<8x256xf32>
    %237 = arith.addf %236, %235 : vector<8x256xf32>
    %238 = tpu.reciprocal %237 {approx = true} : vector<8x256xf32> -> vector<8x256xf32>
    %239 = arith.mulf %232, %238 : vector<8x256xf32>
    %c0_95 = arith.constant 0 : index
    %c0_96 = arith.constant 0 : index
    %c0_97 = arith.constant 0 : index
    %240 = vector.load %arg9[%c0_95, %c0_96, %c0_97] : memref<1x8x256xf32, #tpu.memory_space<vmem>>, vector<1x8x256xf32>
    %241 = vector.shape_cast %240 : vector<1x8x256xf32> to vector<8x256xf32>
    %242 = vector.shape_cast %239 : vector<8x256xf32> to vector<1x8x256xf32>
    tpu.vector_store %arg9[%c0_95, %c0_96, %c0_97], %242 {strides = array<i32>} : memref<1x8x256xf32, #tpu.memory_space<vmem>>, vector<1x8x256xf32>,
    return
  }
  func.func @transform_0(%arg0: i32) -> (i32, i32, i32) {
    %c0_i32 = arith.constant 0 : i32
    %c0_i32_0 = arith.constant 0 : i32
    %c0_i32_1 = arith.constant 0 : i32
    return %arg0, %c0_i32, %c0_i32_0 : i32, i32, i32
  }
  func.func @transform_1(%arg0: i32) -> (i32, i32, i32) {
    %c0_i32 = arith.constant 0 : i32
    %c0_i32_0 = arith.constant 0 : i32
    %c0_i32_1 = arith.constant 0 : i32
    %c0_i32_2 = arith.constant 0 : i32
    return %c0_i32, %c0_i32_0, %c0_i32_1 : i32, i32, i32
  }
  func.func @transform_2(%arg0: i32) -> (i32, i32, i32) {
    %c0_i32 = arith.constant 0 : i32
    %c0_i32_0 = arith.constant 0 : i32
    %c0_i32_1 = arith.constant 0 : i32
    %c0_i32_2 = arith.constant 0 : i32
    return %c0_i32, %c0_i32_0, %c0_i32_1 : i32, i32, i32
  }
  func.func @transform_3(%arg0: i32) -> (i32, i32, i32) {
    %c0_i32 = arith.constant 0 : i32
    %c0_i32_0 = arith.constant 0 : i32
    %c0_i32_1 = arith.constant 0 : i32
    %c0_i32_2 = arith.constant 0 : i32
    return %c0_i32, %c0_i32_0, %c0_i32_1 : i32, i32, i32
  }
  func.func @transform_4(%arg0: i32) -> (i32, i32, i32) {
    %c0_i32 = arith.constant 0 : i32
    %c0_i32_0 = arith.constant 0 : i32
    %c0_i32_1 = arith.constant 0 : i32
    %c0_i32_2 = arith.constant 0 : i32
    return %c0_i32, %c0_i32_0, %c0_i32_1 : i32, i32, i32
  }
  func.func @transform_5(%arg0: i32) -> (i32, i32) {
    %c0_i32 = arith.constant 0 : i32
    %c0_i32_0 = arith.constant 0 : i32
    %c0_i32_1 = arith.constant 0 : i32
    return %c0_i32, %c0_i32_0 : i32, i32
  }
  func.func @transform_6(%arg0: i32) -> (i32, i32) {
    %c0_i32 = arith.constant 0 : i32
    %c0_i32_0 = arith.constant 0 : i32
    %c0_i32_1 = arith.constant 0 : i32
    return %c0_i32, %c0_i32_0 : i32, i32
  }
  func.func @transform_7(%arg0: i32) -> (i32, i32) {
    %c0_i32 = arith.constant 0 : i32
    %c0_i32_0 = arith.constant 0 : i32
    %c0_i32_1 = arith.constant 0 : i32
    return %c0_i32, %c0_i32_0 : i32, i32
  }
  func.func @transform_8(%arg0: i32) -> (i32, i32, i32) {
    %c0_i32 = arith.constant 0 : i32
    %c0_i32_0 = arith.constant 0 : i32
    %c0_i32_1 = arith.constant 0 : i32
    return %arg0, %c0_i32, %c0_i32_0 : i32, i32, i32
  }
}

</mosaic_0001>

<llo_original>
// kernel: tpu_custom_call.1
$region0: #{tpu_custom_call.1}
  #allocation0 [shape = 'u32[]', space=smem, size = 0x4, offset = 0x4, fixed_abs, tag = 'smem constant byte address 0x4 - core index']
  #allocation1 [shape = 'u32[144,128]{1,0:T(1,128)}', space=vmem, size = 0x12000, scoped, tag = 'internal scratch']
  %s0 = inlined_call_operand.hbm [shape: bf16[2,4,256], index: 0, kind: input, shape index: {}]
  %s1 = inlined_call_operand.hbm [shape: bf16[2,8,4], index: 1, kind: input, shape index: {}]
  %s2 = inlined_call_operand.hbm [shape: f32[2,8,2], index: 2, kind: input, shape index: {}]
  %s3 = inlined_call_operand.hbm [shape: bf16[4,8,72], index: 3, kind: input, shape index: {}]
  %s4 = inlined_call_operand.hbm [shape: f32[4,8,2], index: 4, kind: input, shape index: {}]
  %s5 = inlined_call_operand.hbm [shape: bf16[8,48], index: 5, kind: input, shape index: {}]
  %s6 = inlined_call_operand.hbm [shape: f32[8,2], index: 6, kind: input, shape index: {}]
  %s7 = inlined_call_operand.hbm [shape: f32[9,256], index: 7, kind: input, shape index: {}]
  %s8 = inlined_call_operand.hbm [shape: f32[2,8,256], index: 8, kind: output, shape index: {}]
  %s9 = sld [smem:[#allocation0]]
  $region97: #{tpu_custom_call.1} parent=0
    _
  %s11 = ssub.s32 1, %s9
  %s12 = scalar_select 0, %s11, %s9
  $region1: #{tpu_custom_call.1} parent=0
    #allocation2 [shape = 'u8[4096]{0}', space=vmem, size = 0x1000, scoped, tag = 'input window, operand 0']
    #allocation3 [shape = 's32[2]{0}', space=sflag, size = 0x8, scoped, tag = 'scoped memory for tpu_custom_call.1']
    #allocation4 [shape = 's32[2]{0}', space=sflag, size = 0x8, scoped, tag = 'scoped memory for tpu_custom_call.1']
    #allocation5 [shape = 'u8[4096]{0}', space=vmem, size = 0x1000, scoped, tag = 'input window, operand 1, single buffered']
    #allocation6 [shape = 's32[1]{0}', space=sflag, size = 0x4, scoped, tag = 'scoped memory for tpu_custom_call.1']
    #allocation7 [shape = 'u8[8192]{0}', space=vmem, size = 0x2000, scoped, tag = 'input window, operand 2, single buffered']
    #allocation8 [shape = 'u8[8192]{0}', space=vmem, size = 0x2000, scoped, tag = 'input window, operand 3, single buffered']
    #allocation9 [shape = 's32[1]{0}', space=sflag, size = 0x4, scoped, tag = 'scoped memory for tpu_custom_call.1']
    #allocation10 [shape = 'u8[16384]{0}', space=vmem, size = 0x4000, scoped, tag = 'input window, operand 4, single buffered']
    #allocation11 [shape = 'u8[2048]{0}', space=vmem, size = 0x800, scoped, tag = 'input window, operand 5, single buffered']
    #allocation12 [shape = 's32[1]{0}', space=sflag, size = 0x4, scoped, tag = 'scoped memory for tpu_custom_call.1']
    #allocation13 [shape = 'u8[4096]{0}', space=vmem, size = 0x1000, scoped, tag = 'input window, operand 6, single buffered']
    #allocation14 [shape = 'u8[16384]{0}', space=vmem, size = 0x4000, scoped, tag = 'input window, operand 7, single buffered']
    #allocation15 [shape = 's32[1]{0}', space=sflag, size = 0x4, scoped, tag = 'scoped memory for tpu_custom_call.1']
    #allocation16 [shape = 'u8[16384]{0}', space=vmem, size = 0x4000, scoped, tag = 'output window, operand 0']
    %13 = vsyncpa [#allocation3], 0
    %s14 = scalar_lea.sflag [#allocation3], 1
    %15 = vsyncpa %s14, 0
    %16 = vsyncpa [#allocation6], 0
    %17 = vsyncpa [#allocation9], 0
    %18 = vsyncpa [#allocation12], 0
    %19 = vsyncpa [#allocation15], 0
    %20 = vsyncpa [#allocation4], 0
    %s21 = scalar_lea.sflag [#allocation4], 1
    %22 = vsyncpa %s21, 0
    loop: start=0, step=1, limit=4
    $region2: #{tpu_custom_call.1} parent=1 // loop_pre_header
      _
    $region3: #{tpu_custom_call.1} parent=1 // loop_header
      %s24 = sphi 0, %s28
      %p25 = scmp.ge.s32.totalorder %s24, 4
      %s34 = sphi 0, %s36
      %s37 = sphi 0, %s34
      %s38 = sphi 0, %s37
      %s54 = sphi 0, %s38
      %s58 = sphi 0, %s58
      %s60 = sphi 0, %s58
      %s61 = sphi 0, %s60
      %s75 = sphi 0, %s61
      %s79 = sphi 0, %s79
      %s81 = sphi 0, %s79
      %s82 = sphi 0, %s81
      %s96 = sphi 0, %s82
      %s100 = sphi 0, %s100
      %s102 = sphi 0, %s100
      %s103 = sphi 0, %s102
      %s117 = sphi 0, %s103
      %s121 = sphi 0, %s121
      %s123 = sphi 0, %s121
      %s124 = sphi 0, %s123
      %s138 = sphi 0, %s124
      %s142 = sphi 0, %s142
      %s144 = sphi 0, %s142
      %s145 = sphi 0, %s144
      %s159 = sphi 0, %s145
      %s163 = sphi 0, %s163
      %s165 = sphi 0, %s163
      %s166 = sphi 0, %s165
      %s180 = sphi 0, %s166
      %s184 = sphi 0, %s184
      %s186 = sphi 0, %s184
      %s187 = sphi 0, %s186
      %s201 = sphi 0, %s187
      %s207 = sphi 0, %s209
      %s210 = sphi 0, %s207
      %s211 = sphi 0, %s210
      %s227 = sphi 0, %s211
    $region4: #{tpu_custom_call.1} parent=1 // loop_header_branch
      %27 = sbr.rel (%p25) target = $region8
    $region5: #{tpu_custom_call.1} parent=1 // loop_body
      %s29 = ssub.s32 %s24, 1
      %s30 = ssub.s32 %s24, 2
      %s31 = sadd.s32 %s24, 1
      %s32 = ssub.s32 %s24, %s31
      %p33 = scmp.eq.s32.totalorder %s32, 0
      %s35 = sadd.s32 %s34, 1
      %s36 = scalar_select %p33, %s34, %s35
      %p39 = pneg %p33
      %p40 = scmp.eq.s32.totalorder %s24, 1
      %p41 = por %p39, %p40
      %p42 = scmp.ne.s32.totalorder %s34, %s37
      %p43 = scmp.eq.s32.totalorder %s24, 0
      %p44 = por %p42, %p43
      %p45 = scmp.ne.s32.totalorder %s34, %s37
      %p46 = scmp.eq.s32.totalorder %s29, 1
      %p47 = por %p45, %p46
      %p48 = scmp.ne.s32.totalorder %s37, %s38
      %p49 = scmp.eq.s32.totalorder %s29, 0
      %p50 = por %p48, %p49
      %p51 = scmp.ne.s32.totalorder %s37, %s38
      %p52 = scmp.eq.s32.totalorder %s30, 1
      %p53 = por %p51, %p52
      %p55 = scmp.ne.s32.totalorder %s38, %s54
      %p56 = scmp.eq.s32.totalorder %s30, 0
      %p57 = por %p55, %p56
      %s59 = sadd.s32 %s58, 1
      %p62 = scmp.eq.s32.totalorder %s24, 1
      %p63 = scmp.ne.s32.totalorder %s58, %s60
      %p64 = scmp.eq.s32.totalorder %s24, 0
      %p65 = por %p63, %p64
      %p66 = scmp.ne.s32.totalorder %s58, %s60
      %p67 = scmp.eq.s32.totalorder %s29, 1
      %p68 = por %p66, %p67
      %p69 = scmp.ne.s32.totalorder %s60, %s61
      %p70 = scmp.eq.s32.totalorder %s29, 0
      %p71 = por %p69, %p70
      %p72 = scmp.ne.s32.totalorder %s60, %s61
      %p73 = scmp.eq.s32.totalorder %s30, 1
      %p74 = por %p72, %p73
      %p76 = scmp.ne.s32.totalorder %s61, %s75
      %p77 = scmp.eq.s32.totalorder %s30, 0
      %p78 = por %p76, %p77
      %s80 = sadd.s32 %s79, 1
      %p83 = scmp.eq.s32.totalorder %s24, 1
      %p84 = scmp.ne.s32.totalorder %s79, %s81
      %p85 = scmp.eq.s32.totalorder %s24, 0
      %p86 = por %p84, %p85
      %p87 = scmp.ne.s32.totalorder %s79, %s81
      %p88 = scmp.eq.s32.totalorder %s29, 1
      %p89 = por %p87, %p88
      %p90 = scmp.ne.s32.totalorder %s81, %s82
      %p91 = scmp.eq.s32.totalorder %s29, 0
      %p92 = por %p90, %p91
      %p93 = scmp.ne.s32.totalorder %s81, %s82
      %p94 = scmp.eq.s32.totalorder %s30, 1
      %p95 = por %p93, %p94
      %p97 = scmp.ne.s32.totalorder %s82, %s96
      %p98 = scmp.eq.s32.totalorder %s30, 0
      %p99 = por %p97, %p98
      %s101 = sadd.s32 %s100, 1
      %p104 = scmp.eq.s32.totalorder %s24, 1
      %p105 = scmp.ne.s32.totalorder %s100, %s102
      %p106 = scmp.eq.s32.totalorder %s24, 0
      %p107 = por %p105, %p106
      %p108 = scmp.ne.s32.totalorder %s100, %s102
      %p109 = scmp.eq.s32.totalorder %s29, 1
      %p110 = por %p108, %p109
      %p111 = scmp.ne.s32.totalorder %s102, %s103
      %p112 = scmp.eq.s32.totalorder %s29, 0
      %p113 = por %p111, %p112
      %p114 = scmp.ne.s32.totalorder %s102, %s103
      %p115 = scmp.eq.s32.totalorder %s30, 1
      %p116 = por %p114, %p115
      %p118 = scmp.ne.s32.totalorder %s103, %s117
      %p119 = scmp.eq.s32.totalorder %s30, 0
      %p120 = por %p118, %p119
      %s122 = sadd.s32 %s121, 1
      %p125 = scmp.eq.s32.totalorder %s24, 1
      %p126 = scmp.ne.s32.totalorder %s121, %s123
      %p127 = scmp.eq.s32.totalorder %s24, 0
      %p128 = por %p126, %p127
      %p129 = scmp.ne.s32.totalorder %s121, %s123
      %p130 = scmp.eq.s32.totalorder %s29, 1
      %p131 = por %p129, %p130
      %p132 = scmp.ne.s32.totalorder %s123, %s124
      %p133 = scmp.eq.s32.totalorder %s29, 0
      %p134 = por %p132, %p133
      %p135 = scmp.ne.s32.totalorder %s123, %s124
      %p136 = scmp.eq.s32.totalorder %s30, 1
      %p137 = por %p135, %p136
      %p139 = scmp.ne.s32.totalorder %s124, %s138
      %p140 = scmp.eq.s32.totalorder %s30, 0
      %p141 = por %p139, %p140
      %s143 = sadd.s32 %s142, 1
      %p146 = scmp.eq.s32.totalorder %s24, 1
      %p147 = scmp.ne.s32.totalorder %s142, %s144
      %p148 = scmp.eq.s32.totalorder %s24, 0
      %p149 = por %p147, %p148
      %p150 = scmp.ne.s32.totalorder %s142, %s144
      %p151 = scmp.eq.s32.totalorder %s29, 1
      %p152 = por %p150, %p151
      %p153 = scmp.ne.s32.totalorder %s144, %s145
      %p154 = scmp.eq.s32.totalorder %s29, 0
      %p155 = por %p153, %p154
      %p156 = scmp.ne.s32.totalorder %s144, %s145
      %p157 = scmp.eq.s32.totalorder %s30, 1
      %p158 = por %p156, %p157
      %p160 = scmp.ne.s32.totalorder %s145, %s159
      %p161 = scmp.eq.s32.totalorder %s30, 0
      %p162 = por %p160, %p161
      %s164 = sadd.s32 %s163, 1
      %p167 = scmp.eq.s32.totalorder %s24, 1
      %p168 = scmp.ne.s32.totalorder %s163, %s165
      %p169 = scmp.eq.s32.totalorder %s24, 0
      %p170 = por %p168, %p169
      %p171 = scmp.ne.s32.totalorder %s163, %s165
      %p172 = scmp.eq.s32.totalorder %s29, 1
      %p173 = por %p171, %p172
      %p174 = scmp.ne.s32.totalorder %s165, %s166
      %p175 = scmp.eq.s32.totalorder %s29, 0
      %p176 = por %p174, %p175
      %p177 = scmp.ne.s32.totalorder %s165, %s166
      %p178 = scmp.eq.s32.totalorder %s30, 1
      %p179 = por %p177, %p178
      %p181 = scmp.ne.s32.totalorder %s166, %s180
      %p182 = scmp.eq.s32.totalorder %s30, 0
      %p183 = por %p181, %p182
      %s185 = sadd.s32 %s184, 1
      %p188 = scmp.eq.s32.totalorder %s24, 1
      %p189 = scmp.ne.s32.totalorder %s184, %s186
      %p190 = scmp.eq.s32.totalorder %s24, 0
      %p191 = por %p189, %p190
      %p192 = scmp.ne.s32.totalorder %s184, %s186
      %p193 = scmp.eq.s32.totalorder %s29, 1
      %p194 = por %p192, %p193
      %p195 = scmp.ne.s32.totalorder %s186, %s187
      %p196 = scmp.eq.s32.totalorder %s29, 0
      %p197 = por %p195, %p196
      %p198 = scmp.ne.s32.totalorder %s186, %s187
      %p199 = scmp.eq.s32.totalorder %s30, 1
      %p200 = por %p198, %p199
      %p202 = scmp.ne.s32.totalorder %s187, %s201
      %p203 = scmp.eq.s32.totalorder %s30, 0
      %p204 = por %p202, %p203
      %s205 = ssub.s32 %s24, %s31
      %p206 = scmp.eq.s32.totalorder %s205, 0
      %s208 = sadd.s32 %s207, 1
      %s209 = scalar_select %p206, %s207, %s208
      %p212 = pneg %p206
      %p213 = scmp.eq.s32.totalorder %s24, 1
      %p214 = por %p212, %p213
      %p215 = scmp.ne.s32.totalorder %s207, %s210
      %p216 = scmp.eq.s32.totalorder %s24, 0
      %p217 = por %p215, %p216
      %p218 = scmp.ne.s32.totalorder %s207, %s210
      %p219 = scmp.eq.s32.totalorder %s29, 1
      %p220 = por %p218, %p219
      %p221 = scmp.ne.s32.totalorder %s210, %s211
      %p222 = scmp.eq.s32.totalorder %s29, 0
      %p223 = por %p221, %p222
      %p224 = scmp.ne.s32.totalorder %s210, %s211
      %p225 = scmp.eq.s32.totalorder %s30, 1
      %p226 = por %p224, %p225
      %p228 = scmp.ne.s32.totalorder %s211, %s227
      %p229 = scmp.eq.s32.totalorder %s30, 0
      %p230 = por %p228, %p229
      %p231 = scmp.le.s32.totalorder 1, %s24
      %p232 = scmp.lt.s32.totalorder %s24, 3
      %p233 = pnand %p231, %p232
      %p234 = pneg %p233
      // Predicated region
      $region9: #{tpu_custom_call.1} parent=5 // pred_check
        _
      $region10: #{tpu_custom_call.1} parent=5 // pred_check_branch
        %236 = sbr.rel (%p233) target = $region12
      $region11: #{tpu_custom_call.1} parent=5 // pred_region
        %s237 = ssub.s32 %s24, 1
        // Predicated region
        $region13: #{tpu_custom_call.1} parent=11 // pred_check
          %p238 = pneg %p71
        $region14: #{tpu_custom_call.1} parent=11 // pred_check_branch
          %240 = sbr.rel (%p238) target = $region16
        $region15: #{tpu_custom_call.1} parent=11 // pred_region
          %s242 = ssub.s32 128, 128
          %243 = vsyncadd [#allocation6], %s242
          %s244 = sshll.u32 [#allocation5], 4
          %s245 = int_to_ptr.vmem [resolvable:$true] %s244
          %250 = dma.hbm_to_vmem [thread:$0]  %s1, 128, %s245, [#allocation6], 64, 64, 4
        $region16: #{tpu_custom_call.1} parent=11 // pred_fallthru
          _
        // Predicated region
        $region17: #{tpu_custom_call.1} parent=11 // pred_check
          %p251 = pneg %p92
        $region18: #{tpu_custom_call.1} parent=11 // pred_check_branch
          %253 = sbr.rel (%p251) target = $region20
        $region19: #{tpu_custom_call.1} parent=11 // pred_region
          %s255 = ssub.s32 256, 256
          %256 = vsyncadd [#allocation6], %s255
          %s257 = sshll.u32 [#allocation7], 4
          %s258 = int_to_ptr.vmem [resolvable:$true] %s257
          %263 = dma.hbm_to_vmem [thread:$0]  %s2, 256, %s258, [#allocation6], 128, 128, 8
        $region20: #{tpu_custom_call.1} parent=11 // pred_fallthru
          _
        // Predicated region
        $region21: #{tpu_custom_call.1} parent=11 // pred_check
          %p264 = pneg %p113
        $region22: #{tpu_custom_call.1} parent=11 // pred_check_branch
          %266 = sbr.rel (%p264) target = $region24
        $region23: #{tpu_custom_call.1} parent=11 // pred_region
          %s268 = ssub.s32 256, 256
          %269 = vsyncadd [#allocation9], %s268
          %s270 = sshll.u32 [#allocation8], 4
          %s271 = int_to_ptr.vmem [resolvable:$true] %s270
          %276 = dma.hbm_to_vmem [thread:$0]  %s3, 256, %s271, [#allocation9], 64, 64, 4
        $region24: #{tpu_custom_call.1} parent=11 // pred_fallthru
          _
        // Predicated region
        $region25: #{tpu_custom_call.1} parent=11 // pred_check
          %p277 = pneg %p134
        $region26: #{tpu_custom_call.1} parent=11 // pred_check_branch
          %279 = sbr.rel (%p277) target = $region28
        $region27: #{tpu_custom_call.1} parent=11 // pred_region
          %s281 = ssub.s32 512, 512
          %282 = vsyncadd [#allocation9], %s281
          %s283 = sshll.u32 [#allocation10], 4
          %s284 = int_to_ptr.vmem [resolvable:$true] %s283
          %289 = dma.hbm_to_vmem [thread:$0]  %s4, 512, %s284, [#allocation9], 128, 128, 8
        $region28: #{tpu_custom_call.1} parent=11 // pred_fallthru
          _
        // Predicated region
        $region29: #{tpu_custom_call.1} parent=11 // pred_check
          %p290 = pneg %p155
        $region30: #{tpu_custom_call.1} parent=11 // pred_check_branch
          %292 = sbr.rel (%p290) target = $region32
        $region31: #{tpu_custom_call.1} parent=11 // pred_region
          %s294 = ssub.s32 64, 64
          %295 = vsyncadd [#allocation12], %s294
          %s297 = sshll.u32 [#allocation11], 4
          %s298 = int_to_ptr.vmem [resolvable:$true] %s297
          %300 = dma.hbm_to_vmem [thread:$0]  %s5, 64, %s298, [#allocation12]
        $region32: #{tpu_custom_call.1} parent=11 // pred_fallthru
          _
        // Predicated region
        $region33: #{tpu_custom_call.1} parent=11 // pred_check
          %p301 = pneg %p176
        $region34: #{tpu_custom_call.1} parent=11 // pred_check_branch
          %303 = sbr.rel (%p301) target = $region36
        $region35: #{tpu_custom_call.1} parent=11 // pred_region
          %s305 = ssub.s32 128, 128
          %306 = vsyncadd [#allocation12], %s305
          %s308 = sshll.u32 [#allocation13], 4
          %s309 = int_to_ptr.vmem [resolvable:$true] %s308
          %311 = dma.hbm_to_vmem [thread:$0]  %s6, 128, %s309, [#allocation12]
        $region36: #{tpu_custom_call.1} parent=11 // pred_fallthru
          _
        // Predicated region
        $region37: #{tpu_custom_call.1} parent=11 // pred_check
          %p312 = pneg %p197
        $region38: #{tpu_custom_call.1} parent=11 // pred_check_branch
          %314 = sbr.rel (%p312) target = $region40
        $region39: #{tpu_custom_call.1} parent=11 // pred_region
          %s316 = ssub.s32 512, 512
          %317 = vsyncadd [#allocation15], %s316
          %s318 = sshll.u32 [#allocation14], 4
          %s319 = int_to_ptr.vmem [resolvable:$true] %s318
          %324 = dma.hbm_to_vmem [thread:$0]  %s7, 512, %s319, [#allocation15], 256, 256, 16
        $region40: #{tpu_custom_call.1} parent=11 // pred_fallthru
          _
      $region12: #{tpu_custom_call.1} parent=5 // pred_fallthru
        _
      %p325 = scmp.lt.s32.totalorder %s24, 2
      // Predicated region
      $region41: #{tpu_custom_call.1} parent=5 // pred_check
        %p326 = pneg %p325
      $region42: #{tpu_custom_call.1} parent=5 // pred_check_branch
        %328 = sbr.rel (%p326) target = $region44
      $region43: #{tpu_custom_call.1} parent=5 // pred_region
        // Predicated region
        $region45: #{tpu_custom_call.1} parent=43 // pred_check
          %p329 = pneg %p44
        $region46: #{tpu_custom_call.1} parent=43 // pred_check_branch
          %331 = sbr.rel (%p329) target = $region48
        $region47: #{tpu_custom_call.1} parent=43 // pred_region
          %s332 = sand.u32 %s34, 1
          %s333 = scalar_lea.sflag [#allocation3], %s332
          %s334 = sand.u32 %s34, 1
          %s335 = smul.addr %s334, 4
          %s336 = scalar_lea.vmem [#allocation2], %s335
          %s338 = ssub.s32 64, 64
          %339 = vsyncadd %s333, %s338
          %s340 = smul.addr %s24, 2
          %s341 = smul.addr %s340, 32
          %s342 = scalar_lea.hbm %s0, %s341
          %s344 = sshll.u32 %s336, 4
          %s345 = int_to_ptr.vmem [resolvable:$true] %s344
          %347 = dma.hbm_to_vmem [thread:$0]  %s342, 64, %s345, %s333
        $region48: #{tpu_custom_call.1} parent=43 // pred_fallthru
          _
      $region44: #{tpu_custom_call.1} parent=5 // pred_fallthru
        _
      %p348 = scmp.le.s32.totalorder 1, %s24
      %p349 = scmp.lt.s32.totalorder %s24, 3
      %p350 = pnand %p348, %p349
      %p351 = pneg %p350
      // Predicated region
      $region49: #{tpu_custom_call.1} parent=5 // pred_check
        _
      $region50: #{tpu_custom_call.1} parent=5 // pred_check_branch
        %353 = sbr.rel (%p350) target = $region52
      $region51: #{tpu_custom_call.1} parent=5 // pred_region
        %s354 = ssub.s32 %s24, 1
        %s355 = sand.u32 %s37, 1
        %s356 = scalar_lea.sflag [#allocation3], %s355
        %s357 = sand.u32 %s37, 1
        %s358 = smul.addr %s357, 4
        %s359 = scalar_lea.vmem [#allocation2], %s358
        // Predicated region
        $region53: #{tpu_custom_call.1} parent=51 // pred_check
          %p360 = pneg %p50
        $region54: #{tpu_custom_call.1} parent=51 // pred_check_branch
          %362 = sbr.rel (%p360) target = $region56
        $region55: #{tpu_custom_call.1} parent=51 // pred_region
          %363 = dma.done %s356, 64
        $region56: #{tpu_custom_call.1} parent=51 // pred_fallthru
          _
        // Predicated region
        $region57: #{tpu_custom_call.1} parent=51 // pred_check
          %p364 = pneg %p71
        $region58: #{tpu_custom_call.1} parent=51 // pred_check_branch
          %366 = sbr.rel (%p364) target = $region60
        $region59: #{tpu_custom_call.1} parent=51 // pred_region
          %367 = dma.done [#allocation6], 128
        $region60: #{tpu_custom_call.1} parent=51 // pred_fallthru
          _
        // Predicated region
        $region61: #{tpu_custom_call.1} parent=51 // pred_check
          %p368 = pneg %p92
        $region62: #{tpu_custom_call.1} parent=51 // pred_check_branch
          %370 = sbr.rel (%p368) target = $region64
        $region63: #{tpu_custom_call.1} parent=51 // pred_region
          %371 = dma.done [#allocation6], 256
        $region64: #{tpu_custom_call.1} parent=51 // pred_fallthru
          _
        // Predicated region
        $region65: #{tpu_custom_call.1} parent=51 // pred_check
          %p372 = pneg %p113
        $region66: #{tpu_custom_call.1} parent=51 // pred_check_branch
          %374 = sbr.rel (%p372) target = $region68
        $region67: #{tpu_custom_call.1} parent=51 // pred_region
          %375 = dma.done [#allocation9], 256
        $region68: #{tpu_custom_call.1} parent=51 // pred_fallthru
          _
        // Predicated region
        $region69: #{tpu_custom_call.1} parent=51 // pred_check
          %p376 = pneg %p134
        $region70: #{tpu_custom_call.1} parent=51 // pred_check_branch
          %378 = sbr.rel (%p376) target = $region72
        $region71: #{tpu_custom_call.1} parent=51 // pred_region
          %379 = dma.done [#allocation9], 512
        $region72: #{tpu_custom_call.1} parent=51 // pred_fallthru
          _
        // Predicated region
        $region73: #{tpu_custom_call.1} parent=51 // pred_check
          %p380 = pneg %p155
        $region74: #{tpu_custom_call.1} parent=51 // pred_check_branch
          %382 = sbr.rel (%p380) target = $region76
        $region75: #{tpu_custom_call.1} parent=51 // pred_region
          %383 = dma.done [#allocation12], 64
        $region76: #{tpu_custom_call.1} parent=51 // pred_fallthru
          _
        // Predicated region
        $region77: #{tpu_custom_call.1} parent=51 // pred_check
          %p384 = pneg %p176
        $region78: #{tpu_custom_call.1} parent=51 // pred_check_branch
          %386 = sbr.rel (%p384) target = $region80
        $region79: #{tpu_custom_call.1} parent=51 // pred_region
          %387 = dma.done [#allocation12], 128
        $region80: #{tpu_custom_call.1} parent=51 // pred_fallthru
          _
        // Predicated region
        $region81: #{tpu_custom_call.1} parent=51 // pred_check
          %p388 = pneg %p197
        $region82: #{tpu_custom_call.1} parent=51 // pred_check_branch
          %390 = sbr.rel (%p388) target = $region84
        $region83: #{tpu_custom_call.1} parent=51 // pred_region
          %391 = dma.done [#allocation15], 512
        $region84: #{tpu_custom_call.1} parent=51 // pred_fallthru
          _
        %s392 = sand.u32 %s37, 1
        %s393 = scalar_lea.sflag [#allocation3], %s392
        %s394 = sand.u32 %s37, 1
        %s395 = smul.addr %s394, 4
        %s396 = scalar_lea.vmem [#allocation2], %s395
        %p397 = pneg %p50
        %p398 = pneg %p47
        %p399 = pneg %p71
        %p400 = pneg %p68
        %p401 = pneg %p92
        %p402 = pneg %p89
        %p403 = pneg %p113
        %p404 = pneg %p110
        %p405 = pneg %p134
        %p406 = pneg %p131
        %p407 = pneg %p155
        %p408 = pneg %p152
        %p409 = pneg %p176
        %p410 = pneg %p173
        %p411 = pneg %p197
        %p412 = pneg %p194
        %p413 = pneg %p223
        %p414 = pneg %p220
        %s415 = sand.u32 %s210, 1
        %s416 = scalar_lea.sflag [#allocation4], %s415
        %s417 = sand.u32 %s210, 1
        %s418 = smul.addr %s417, 16
        %s419 = scalar_lea.vmem [#allocation16], %s418
        %v421 = vld [vmem:[%s359] sm:$0xf]
        %v422 = vld [vmem:[#allocation5] sm:$0xf]
        %v425 = vunpack.c.l.s4 1983009808
        %v426 = vunpack.c.0.s8 %v425
        %v427 = vlaneseq
        %v428 = vshrl.u32 %v427, 7
        %v429 = vsub.s32 %v426, %v428
        %v430 = vrot.slane %v421, %v429
        %v431 = vcombine.high %v430, %v430
        %vm432 = vcmask 31744
        %v434 = vsel %vm432, %v422, 0
        %vm436 = vcmask 1041408
        %v438 = vsel %vm436, %v430, 0
        %v441 = vsel %vm436, %v431, 0
        %443 = vmatprep.subr.bf16.mxu0 %v441
        %444 = vmatpush1.bf16.msra.mxu0 %v438
        %445 = vmatprep.subr.bf16.mxu0 0
        %446 = vmatpush1.bf16.msra.mxu0 0
        %447 = vmatprep.subr.bf16.mxu0 0
        %448 = vmatpush1.bf16.msra.mxu0 0
        %449 = vmatprep.subr.bf16.mxu0 0
        %450 = vmatpush1.bf16.msra.mxu0 0
        %451 = vmatprep.subr.bf16.mxu0 0
        %452 = vmatpush1.bf16.msra.mxu0 0
        %453 = vmatprep.subr.bf16.mxu0 0
        %454 = vmatpush1.bf16.msra.mxu0 0
        %455 = vmatprep.subr.bf16.mxu0 0
        %456 = vmatpush1.bf16.msra.mxu0 0
        %457 = vmatprep.subr.bf16.mxu0 0
        %458 = vmatpush1.bf16.msra.mxu0 0
        %459 = vmatprep.subr.bf16.mxu0 0
        %460 = vmatpush1.bf16.msra.mxu0 0
        %461 = vmatprep.subr.bf16.mxu0 0
        %462 = vmatpush1.bf16.msra.mxu0 0
        %463 = vmatprep.subr.bf16.mxu0 0
        %464 = vmatpush1.bf16.msra.mxu0 0
        %465 = vmatprep.subr.bf16.mxu0 0
        %466 = vmatpush1.bf16.msra.mxu0 0
        %467 = vmatprep.subr.bf16.mxu0 0
        %468 = vmatpush1.bf16.msra.mxu0 0
        %469 = vmatprep.subr.bf16.mxu0 0
        %470 = vmatpush1.bf16.msra.mxu0 0
        %471 = vmatprep.subr.bf16.mxu0 0
        %472 = vmatpush1.bf16.msra.mxu0 0
        %473 = vmatprep.subr.bf16.mxu0 0
        %474 = vmatpush1.bf16.msra.mxu0 0
        %475 = vmatprep.mubr.bf16.mxu0 0
        %476 = vmatmul.mubr.bf16.gmra.mrb[0].mxu0 %v434
        %v477 = vpop.f32.mrb[0].mxu0
        %v478 = vadd.f32 0.0, %v477
        %v479 = vpop.f32.mrb[0].mxu0
        %v480 = vadd.f32 0.0, %v479
        %v481 = vpop.f32.mrb[0].mxu0
        %v482 = vpop.f32.mrb[0].mxu0
        %483 = vdwg.mxu0
        %v484 = vld [vmem:[#allocation7] sm:$0xff]
        %486 = vset.pattern.permute.xlu0 0
        %487 = vperm.xlu0 %486, %v484
        %v488 = vpop.permute.xlu0 %487
        %v490 = vmul.f32 %v478, %v488
        %v491 = vmul.f32 %v480, %v488
        %492 = vset.pattern.permute.xlu0 1
        %493 = vperm.xlu0 %492, %v484
        %v494 = vpop.permute.xlu0 %493
        %v496 = vadd.f32 %v490, %v494
        %v497 = vadd.f32 %v491, %v494
        %v498 = vsub.f32 0.0, %v496
        %v499 = vsub.f32 0.0, %v497
        %v500 = vmul.f32 %v498, 1.442695
        %v501 = vpow.pop %v500
        %v502 = vmul.f32 %v499, 1.442695
        %v503 = vpow.pop %v502
        %v504 = vadd.f32 %v501, 1.0
        %v505 = vadd.f32 %v503, 1.0
        %v506 = vrcp.pop %v504
        %v507 = vrcp.pop %v505
        %v508 = vmul.f32 %v496, %v506
        %v509 = vmul.f32 %v497, %v507
        %s510 = scalar_lea.vmem [#allocation5], 4
        %v511 = vld [vmem:[%s510] sm:$0xf]
        %v513 = vsel %vm432, %v511, 0
        %515 = vmatprep.subr.bf16.mxu0 %v441
        %516 = vmatpush1.bf16.msra.mxu0 %v438
        %517 = vmatprep.subr.bf16.mxu0 0
        %518 = vmatpush1.bf16.msra.mxu0 0
        %519 = vmatprep.subr.bf16.mxu0 0
        %520 = vmatpush1.bf16.msra.mxu0 0
        %521 = vmatprep.subr.bf16.mxu0 0
        %522 = vmatpush1.bf16.msra.mxu0 0
        %523 = vmatprep.subr.bf16.mxu0 0
        %524 = vmatpush1.bf16.msra.mxu0 0
        %525 = vmatprep.subr.bf16.mxu0 0
        %526 = vmatpush1.bf16.msra.mxu0 0
        %527 = vmatprep.subr.bf16.mxu0 0
        %528 = vmatpush1.bf16.msra.mxu0 0
        %529 = vmatprep.subr.bf16.mxu0 0
        %530 = vmatpush1.bf16.msra.mxu0 0
        %531 = vmatprep.subr.bf16.mxu0 0
        %532 = vmatpush1.bf16.msra.mxu0 0
        %533 = vmatprep.subr.bf16.mxu0 0
        %534 = vmatpush1.bf16.msra.mxu0 0
        %535 = vmatprep.subr.bf16.mxu0 0
        %536 = vmatpush1.bf16.msra.mxu0 0
        %537 = vmatprep.subr.bf16.mxu0 0
        %538 = vmatpush1.bf16.msra.mxu0 0
        %539 = vmatprep.subr.bf16.mxu0 0
        %540 = vmatpush1.bf16.msra.mxu0 0
        %541 = vmatprep.subr.bf16.mxu0 0
        %542 = vmatpush1.bf16.msra.mxu0 0
        %543 = vmatprep.subr.bf16.mxu0 0
        %544 = vmatpush1.bf16.msra.mxu0 0
        %545 = vmatprep.subr.bf16.mxu0 0
        %546 = vmatpush1.bf16.msra.mxu0 0
        %547 = vmatprep.mubr.bf16.mxu0 0
        %548 = vmatmul.mubr.bf16.gmra.mrb[0].mxu0 %v513
        %v549 = vpop.f32.mrb[0].mxu0
        %v550 = vadd.f32 0.0, %v549
        %v551 = vpop.f32.mrb[0].mxu0
        %v552 = vadd.f32 0.0, %v551
        %v553 = vpop.f32.mrb[0].mxu0
        %v554 = vpop.f32.mrb[0].mxu0
        %555 = vdwg.mxu0
        %s556 = scalar_lea.vmem [#allocation7], 8
        %v557 = vld [vmem:[%s556] sm:$0xff]
        %559 = vset.pattern.permute.xlu0 0
        %560 = vperm.xlu0 %559, %v557
        %v561 = vpop.permute.xlu0 %560
        %v563 = vmul.f32 %v550, %v561
        %v564 = vmul.f32 %v552, %v561
        %565 = vset.pattern.permute.xlu0 1
        %566 = vperm.xlu0 %565, %v557
        %v567 = vpop.permute.xlu0 %566
        %v569 = vadd.f32 %v563, %v567
        %v570 = vadd.f32 %v564, %v567
        %v571 = vsub.f32 0.0, %v569
        %v572 = vsub.f32 0.0, %v570
        %v573 = vmul.f32 %v571, 1.442695
        %v574 = vpow.pop %v573
        %v575 = vmul.f32 %v572, 1.442695
        %v576 = vpow.pop %v575
        %v577 = vadd.f32 %v574, 1.0
        %v578 = vadd.f32 %v576, 1.0
        %v579 = vrcp.pop %v577
        %v580 = vrcp.pop %v578
        %v581 = vmul.f32 %v569, %v579
        %v582 = vmul.f32 %v570, %v580
        %v583 = vld [vmem:[#allocation14] ss:$8 sm:$0x3]
        %s584 = scalar_lea.vmem [#allocation14], 1
        %v585 = vld [vmem:[%s584] ss:$8 sm:$0x3]
        %s586 = scalar_lea.vmem [#allocation14], 2
        %v587 = vld [vmem:[%s586] ss:$8 sm:$0x3]
        %s588 = scalar_lea.vmem [#allocation14], 3
        %v589 = vld [vmem:[%s588] ss:$8 sm:$0x3]
        %s590 = scalar_lea.vmem [#allocation14], 5
        %v591 = vld [vmem:[%s590] ss:$8 sm:$0x3]
        %s592 = scalar_lea.vmem [#allocation14], 6
        %v593 = vld [vmem:[%s592] ss:$8 sm:$0x3]
        %s594 = scalar_lea.vmem [#allocation14], 7
        %v595 = vld [vmem:[%s594] ss:$8 sm:$0x3]
        %s596 = scalar_lea.vmem [#allocation14], 16
        %v597 = vld [vmem:[%s596] ss:$8 sm:$0x3]
        %598 = vrot.lane.b32.xlu0 %v581, 17
        %v599 = vpop.permute.xlu0 %598
        %600 = vrot.lane.b32.xlu0 %v582, 17
        %v601 = vpop.permute.xlu0 %600
        %v602 = vlaneseq
        %v603 = vand.u32 %v602, 127
        %vm604 = vcmp.lt.s32.totalorder %v603, 17
        %v605 = vsel %vm604, %v599, %v601
        %v606 = vsel %vm604, %v601, %v599
        %v608 = vlaneseq
        %v609 = vshrl.u32 %v608, 7
        %v610 = vsub.s32 0, %v609
        %v611 = vrot.slane %v583, %v610
        %v612 = vlaneseq
        %v613 = vshrl.u32 %v612, 7
        %v614 = vsub.s32 1, %v613
        %v615 = vrot.slane %v583, %v614
        %v618 = vmul.f32 %v606, %v611
        %v619 = vmul.f32 %v605, %v615
        %620 = vrot.lane.b32.xlu0 %v581, 16
        %v621 = vpop.permute.xlu0 %620
        %622 = vrot.lane.b32.xlu0 %v582, 16
        %v623 = vpop.permute.xlu0 %622
        %vm624 = vcmp.lt.s32.totalorder %v603, 16
        %v625 = vsel %vm624, %v621, %v623
        %v626 = vsel %vm624, %v623, %v621
        %v628 = vlaneseq
        %v629 = vshrl.u32 %v628, 7
        %v630 = vsub.s32 0, %v629
        %v631 = vrot.slane %v585, %v630
        %v632 = vlaneseq
        %v633 = vshrl.u32 %v632, 7
        %v634 = vsub.s32 1, %v633
        %v635 = vrot.slane %v585, %v634
        %v638 = vmul.f32 %v626, %v631
        %v639 = vmul.f32 %v625, %v635
        %640 = vrot.lane.b32.xlu0 %v581, 15
        %v641 = vpop.permute.xlu0 %640
        %642 = vrot.lane.b32.xlu0 %v582, 15
        %v643 = vpop.permute.xlu0 %642
        %vm644 = vcmp.lt.s32.totalorder %v603, 15
        %v645 = vsel %vm644, %v641, %v643
        %v646 = vsel %vm644, %v643, %v641
        %v648 = vlaneseq
        %v649 = vshrl.u32 %v648, 7
        %v650 = vsub.s32 0, %v649
        %v651 = vrot.slane %v587, %v650
        %v652 = vlaneseq
        %v653 = vshrl.u32 %v652, 7
        %v654 = vsub.s32 1, %v653
        %v655 = vrot.slane %v587, %v654
        %v658 = vmul.f32 %v646, %v651
        %v659 = vmul.f32 %v645, %v655
        %660 = vrot.lane.b32.xlu0 %v581, 1
        %v661 = vpop.permute.xlu0 %660
        %662 = vrot.lane.b32.xlu0 %v582, 1
        %v663 = vpop.permute.xlu0 %662
        %vm664 = vcmp.lt.s32.totalorder %v603, 1
        %v665 = vsel %vm664, %v661, %v663
        %v666 = vsel %vm664, %v663, %v661
        %v668 = vlaneseq
        %v669 = vshrl.u32 %v668, 7
        %v670 = vsub.s32 0, %v669
        %v671 = vrot.slane %v589, %v670
        %v672 = vlaneseq
        %v673 = vshrl.u32 %v672, 7
        %v674 = vsub.s32 1, %v673
        %v675 = vrot.slane %v589, %v674
        %v678 = vmul.f32 %v666, %v671
        %v679 = vmul.f32 %v665, %v675
        %680 = vrot.lane.b32.xlu0 %v581, 127
        %v681 = vpop.permute.xlu0 %680
        %682 = vrot.lane.b32.xlu0 %v582, 127
        %v683 = vpop.permute.xlu0 %682
        %vm684 = vcmp.lt.s32.totalorder %v603, 127
        %v685 = vsel %vm684, %v681, %v683
        %v686 = vsel %vm684, %v683, %v681
        %v688 = vlaneseq
        %v689 = vshrl.u32 %v688, 7
        %v690 = vsub.s32 0, %v689
        %v691 = vrot.slane %v591, %v690
        %v692 = vlaneseq
        %v693 = vshrl.u32 %v692, 7
        %v694 = vsub.s32 1, %v693
        %v695 = vrot.slane %v591, %v694
        %v698 = vmul.f32 %v685, %v691
        %v699 = vmul.f32 %v686, %v695
        %700 = vrot.lane.b32.xlu0 %v581, 113
        %v701 = vpop.permute.xlu0 %700
        %702 = vrot.lane.b32.xlu0 %v582, 113
        %v703 = vpop.permute.xlu0 %702
        %vm704 = vcmp.lt.s32.totalorder %v603, 113
        %v705 = vsel %vm704, %v701, %v703
        %v706 = vsel %vm704, %v703, %v701
        %v708 = vlaneseq
        %v709 = vshrl.u32 %v708, 7
        %v710 = vsub.s32 0, %v709
        %v711 = vrot.slane %v593, %v710
        %v712 = vlaneseq
        %v713 = vshrl.u32 %v712, 7
        %v714 = vsub.s32 1, %v713
        %v715 = vrot.slane %v593, %v714
        %v718 = vmul.f32 %v705, %v711
        %v719 = vmul.f32 %v706, %v715
        %720 = vrot.lane.b32.xlu0 %v581, 112
        %v721 = vpop.permute.xlu0 %720
        %722 = vrot.lane.b32.xlu0 %v582, 112
        %v723 = vpop.permute.xlu0 %722
        %vm724 = vcmp.lt.s32.totalorder %v603, 112
        %v725 = vsel %vm724, %v721, %v723
        %v726 = vsel %vm724, %v723, %v721
        %v728 = vlaneseq
        %v729 = vshrl.u32 %v728, 7
        %v730 = vsub.s32 0, %v729
        %v731 = vrot.slane %v595, %v730
        %v732 = vlaneseq
        %v733 = vshrl.u32 %v732, 7
        %v734 = vsub.s32 1, %v733
        %v735 = vrot.slane %v595, %v734
        %v738 = vmul.f32 %v725, %v731
        %v739 = vmul.f32 %v726, %v735
        %740 = vrot.lane.b32.xlu0 %v581, 111
        %v741 = vpop.permute.xlu0 %740
        %742 = vrot.lane.b32.xlu0 %v582, 111
        %v743 = vpop.permute.xlu0 %742
        %vm744 = vcmp.lt.s32.totalorder %v603, 111
        %v745 = vsel %vm744, %v741, %v743
        %v746 = vsel %vm744, %v743, %v741
        %v748 = vlaneseq
        %v749 = vshrl.u32 %v748, 7
        %v750 = vsub.s32 0, %v749
        %v751 = vrot.slane %v597, %v750
        %v752 = vlaneseq
        %v753 = vshrl.u32 %v752, 7
        %v754 = vsub.s32 1, %v753
        %v755 = vrot.slane %v597, %v754
        %v758 = vmul.f32 %v745, %v751
        %v759 = vmul.f32 %v746, %v755
        %v760 = vpack.c.bf16 %v638, %v618
        %v761 = vpack.c.bf16 %v639, %v619
        %v762 = vpack.c.bf16 %v678, %v658
        %v763 = vpack.c.bf16 %v679, %v659
        %v764 = vpack.c.bf16 %v698, %v581
        %v765 = vpack.c.bf16 %v699, %v582
        %v766 = vpack.c.bf16 %v738, %v718
        %v767 = vpack.c.bf16 %v739, %v719
        %v768 = vpack.c.bf16 %v758, %v758
        %v769 = vpack.c.bf16 %v759, %v759
        %v770 = vld [vmem:[#allocation8] sm:$0xf]
        %vm771 = vcmask 588800
        %v773 = vsel %vm771, %v770, 0
        %vm775 = vcmask 1043456
        %v777 = vsel %vm775, %v768, 0
        %v780 = vsel %vm775, %v769, 0
        %782 = vmatprep.subr.bf16.mxu0 %v761
        %783 = vmatpush1.bf16.msra.mxu0 %v760
        %784 = vmatprep.subr.bf16.mxu0 %v763
        %785 = vmatpush1.bf16.msra.mxu0 %v762
        %786 = vmatprep.subr.bf16.mxu0 %v765
        %787 = vmatpush1.bf16.msra.mxu0 %v764
        %788 = vmatprep.subr.bf16.mxu0 %v767
        %789 = vmatpush1.bf16.msra.mxu0 %v766
        %790 = vmatprep.subr.bf16.mxu0 %v780
        %791 = vmatpush1.bf16.msra.mxu0 %v777
        %792 = vmatprep.subr.bf16.mxu0 0
        %793 = vmatpush1.bf16.msra.mxu0 0
        %794 = vmatprep.subr.bf16.mxu0 0
        %795 = vmatpush1.bf16.msra.mxu0 0
        %796 = vmatprep.subr.bf16.mxu0 0
        %797 = vmatpush1.bf16.msra.mxu0 0
        %798 = vmatprep.subr.bf16.mxu0 0
        %799 = vmatpush1.bf16.msra.mxu0 0
        %800 = vmatprep.subr.bf16.mxu0 0
        %801 = vmatpush1.bf16.msra.mxu0 0
        %802 = vmatprep.subr.bf16.mxu0 0
        %803 = vmatpush1.bf16.msra.mxu0 0
        %804 = vmatprep.subr.bf16.mxu0 0
        %805 = vmatpush1.bf16.msra.mxu0 0
        %806 = vmatprep.subr.bf16.mxu0 0
        %807 = vmatpush1.bf16.msra.mxu0 0
        %808 = vmatprep.subr.bf16.mxu0 0
        %809 = vmatpush1.bf16.msra.mxu0 0
        %810 = vmatprep.subr.bf16.mxu0 0
        %811 = vmatpush1.bf16.msra.mxu0 0
        %812 = vmatprep.subr.bf16.mxu0 0
        %813 = vmatpush1.bf16.msra.mxu0 0
        %814 = vmatprep.mubr.bf16.mxu0 0
        %815 = vmatmul.mubr.bf16.gmra.mrb[0].mxu0 %v773
        %v816 = vpop.f32.mrb[0].mxu0
        %v817 = vadd.f32 0.0, %v816
        %v818 = vpop.f32.mrb[0].mxu0
        %v819 = vadd.f32 0.0, %v818
        %v820 = vpop.f32.mrb[0].mxu0
        %v821 = vpop.f32.mrb[0].mxu0
        %822 = vdwg.mxu0
        %v823 = vld [vmem:[#allocation10] sm:$0xff]
        %825 = vset.pattern.permute.xlu0 0
        %826 = vperm.xlu0 %825, %v823
        %v827 = vpop.permute.xlu0 %826
        %v829 = vmul.f32 %v817, %v827
        %v830 = vmul.f32 %v819, %v827
        %831 = vset.pattern.permute.xlu0 1
        %832 = vperm.xlu0 %831, %v823
        %v833 = vpop.permute.xlu0 %832
        %v835 = vadd.f32 %v829, %v833
        %v836 = vadd.f32 %v830, %v833
        %v837 = vsub.f32 0.0, %v835
        %v838 = vsub.f32 0.0, %v836
        %v839 = vmul.f32 %v837, 1.442695
        %v840 = vpow.pop %v839
        %v841 = vmul.f32 %v838, 1.442695
        %v842 = vpow.pop %v841
        %v843 = vadd.f32 %v840, 1.0
        %v844 = vadd.f32 %v842, 1.0
        %v845 = vrcp.pop %v843
        %v846 = vrcp.pop %v844
        %v847 = vmul.f32 %v835, %v845
        %v848 = vmul.f32 %v836, %v846
        %849 = vrot.lane.b32.xlu0 %v847, 17
        %v850 = vpop.permute.xlu0 %849
        %851 = vrot.lane.b32.xlu0 %v848, 17
        %v852 = vpop.permute.xlu0 %851
        %v853 = vsel %vm604, %v850, %v852
        %v854 = vsel %vm604, %v852, %v850
        %v855 = vmul.f32 %v854, %v611
        %v856 = vmul.f32 %v853, %v615
        %857 = vrot.lane.b32.xlu0 %v847, 16
        %v858 = vpop.permute.xlu0 %857
        %859 = vrot.lane.b32.xlu0 %v848, 16
        %v860 = vpop.permute.xlu0 %859
        %v861 = vsel %vm624, %v858, %v860
        %v862 = vsel %vm624, %v860, %v858
        %v863 = vmul.f32 %v862, %v631
        %v864 = vmul.f32 %v861, %v635
        %865 = vrot.lane.b32.xlu0 %v847, 15
        %v866 = vpop.permute.xlu0 %865
        %867 = vrot.lane.b32.xlu0 %v848, 15
        %v868 = vpop.permute.xlu0 %867
        %v869 = vsel %vm644, %v866, %v868
        %v870 = vsel %vm644, %v868, %v866
        %v871 = vmul.f32 %v870, %v651
        %v872 = vmul.f32 %v869, %v655
        %873 = vrot.lane.b32.xlu0 %v847, 1
        %v874 = vpop.permute.xlu0 %873
        %875 = vrot.lane.b32.xlu0 %v848, 1
        %v876 = vpop.permute.xlu0 %875
        %v877 = vsel %vm664, %v874, %v876
        %v878 = vsel %vm664, %v876, %v874
        %v879 = vmul.f32 %v878, %v671
        %v880 = vmul.f32 %v877, %v675
        %881 = vrot.lane.b32.xlu0 %v847, 127
        %v882 = vpop.permute.xlu0 %881
        %883 = vrot.lane.b32.xlu0 %v848, 127
        %v884 = vpop.permute.xlu0 %883
        %v885 = vsel %vm684, %v882, %v884
        %v886 = vsel %vm684, %v884, %v882
        %v887 = vmul.f32 %v885, %v691
        %v888 = vmul.f32 %v886, %v695
        %889 = vrot.lane.b32.xlu0 %v847, 113
        %v890 = vpop.permute.xlu0 %889
        %891 = vrot.lane.b32.xlu0 %v848, 113
        %v892 = vpop.permute.xlu0 %891
        %v893 = vsel %vm704, %v890, %v892
        %v894 = vsel %vm704, %v892, %v890
        %v895 = vmul.f32 %v893, %v711
        %v896 = vmul.f32 %v894, %v715
        %897 = vrot.lane.b32.xlu0 %v847, 112
        %v898 = vpop.permute.xlu0 %897
        %899 = vrot.lane.b32.xlu0 %v848, 112
        %v900 = vpop.permute.xlu0 %899
        %v901 = vsel %vm724, %v898, %v900
        %v902 = vsel %vm724, %v900, %v898
        %v903 = vmul.f32 %v901, %v731
        %v904 = vmul.f32 %v902, %v735
        %905 = vrot.lane.b32.xlu0 %v847, 111
        %v906 = vpop.permute.xlu0 %905
        %907 = vrot.lane.b32.xlu0 %v848, 111
        %v908 = vpop.permute.xlu0 %907
        %v909 = vsel %vm744, %v906, %v908
        %v910 = vsel %vm744, %v908, %v906
        %v911 = vmul.f32 %v909, %v751
        %v912 = vmul.f32 %v910, %v755
        %v913 = vpack.c.bf16 %v863, %v855
        %v914 = vpack.c.bf16 %v864, %v856
        %v915 = vpack.c.bf16 %v879, %v871
        %v916 = vpack.c.bf16 %v880, %v872
        %v917 = vpack.c.bf16 %v887, %v847
        %v918 = vpack.c.bf16 %v888, %v848
        %v919 = vpack.c.bf16 %v903, %v895
        %v920 = vpack.c.bf16 %v904, %v896
        %v921 = vpack.c.bf16 %v911, %v911
        %v922 = vpack.c.bf16 %v912, %v912
        %s923 = scalar_lea.vmem [#allocation8], 4
        %v924 = vld [vmem:[%s923] sm:$0xf]
        %v926 = vsel %vm771, %v924, 0
        %v929 = vsel %vm775, %v921, 0
        %v932 = vsel %vm775, %v922, 0
        %934 = vmatprep.subr.bf16.mxu0 %v914
        %935 = vmatpush1.bf16.msra.mxu0 %v913
        %936 = vmatprep.subr.bf16.mxu0 %v916
        %937 = vmatpush1.bf16.msra.mxu0 %v915
        %938 = vmatprep.subr.bf16.mxu0 %v918
        %939 = vmatpush1.bf16.msra.mxu0 %v917
        %940 = vmatprep.subr.bf16.mxu0 %v920
        %941 = vmatpush1.bf16.msra.mxu0 %v919
        %942 = vmatprep.subr.bf16.mxu0 %v932
        %943 = vmatpush1.bf16.msra.mxu0 %v929
        %944 = vmatprep.subr.bf16.mxu0 0
        %945 = vmatpush1.bf16.msra.mxu0 0
        %946 = vmatprep.subr.bf16.mxu0 0
        %947 = vmatpush1.bf16.msra.mxu0 0
        %948 = vmatprep.subr.bf16.mxu0 0
        %949 = vmatpush1.bf16.msra.mxu0 0
        %950 = vmatprep.subr.bf16.mxu0 0
        %951 = vmatpush1.bf16.msra.mxu0 0
        %952 = vmatprep.subr.bf16.mxu0 0
        %953 = vmatpush1.bf16.msra.mxu0 0
        %954 = vmatprep.subr.bf16.mxu0 0
        %955 = vmatpush1.bf16.msra.mxu0 0
        %956 = vmatprep.subr.bf16.mxu0 0
        %957 = vmatpush1.bf16.msra.mxu0 0
        %958 = vmatprep.subr.bf16.mxu0 0
        %959 = vmatpush1.bf16.msra.mxu0 0
        %960 = vmatprep.subr.bf16.mxu0 0
        %961 = vmatpush1.bf16.msra.mxu0 0
        %962 = vmatprep.subr.bf16.mxu0 0
        %963 = vmatpush1.bf16.msra.mxu0 0
        %964 = vmatprep.subr.bf16.mxu0 0
        %965 = vmatpush1.bf16.msra.mxu0 0
        %966 = vmatprep.mubr.bf16.mxu0 0
        %967 = vmatmul.mubr.bf16.gmra.mrb[0].mxu0 %v926
        %v968 = vpop.f32.mrb[0].mxu0
        %v969 = vadd.f32 0.0, %v968
        %v970 = vpop.f32.mrb[0].mxu0
        %v971 = vadd.f32 0.0, %v970
        %v972 = vpop.f32.mrb[0].mxu0
        %v973 = vpop.f32.mrb[0].mxu0
        %974 = vdwg.mxu0
        %s975 = scalar_lea.vmem [#allocation10], 8
        %v976 = vld [vmem:[%s975] sm:$0xff]
        %978 = vset.pattern.permute.xlu0 0
        %979 = vperm.xlu0 %978, %v976
        %v980 = vpop.permute.xlu0 %979
        %v982 = vmul.f32 %v969, %v980
        %v983 = vmul.f32 %v971, %v980
        %984 = vset.pattern.permute.xlu0 1
        %985 = vperm.xlu0 %984, %v976
        %v986 = vpop.permute.xlu0 %985
        %v988 = vadd.f32 %v982, %v986
        %v989 = vadd.f32 %v983, %v986
        %v990 = vsub.f32 0.0, %v988
        %v991 = vsub.f32 0.0, %v989
        %v992 = vmul.f32 %v990, 1.442695
        %v993 = vpow.pop %v992
        %v994 = vmul.f32 %v991, 1.442695
        %v995 = vpow.pop %v994
        %v996 = vadd.f32 %v993, 1.0
        %v997 = vadd.f32 %v995, 1.0
        %v998 = vrcp.pop %v996
        %v999 = vrcp.pop %v997
        %v1000 = vmul.f32 %v988, %v998
        %v1001 = vmul.f32 %v989, %v999
        %1002 = vrot.lane.b32.xlu0 %v1000, 17
        %v1003 = vpop.permute.xlu0 %1002
        %1004 = vrot.lane.b32.xlu0 %v1001, 17
        %v1005 = vpop.permute.xlu0 %1004
        %v1006 = vsel %vm604, %v1003, %v1005
        %v1007 = vsel %vm604, %v1005, %v1003
        %v1008 = vmul.f32 %v1007, %v611
        %v1009 = vmul.f32 %v1006, %v615
        %1010 = vrot.lane.b32.xlu0 %v1000, 16
        %v1011 = vpop.permute.xlu0 %1010
        %1012 = vrot.lane.b32.xlu0 %v1001, 16
        %v1013 = vpop.permute.xlu0 %1012
        %v1014 = vsel %vm624, %v1011, %v1013
        %v1015 = vsel %vm624, %v1013, %v1011
        %v1016 = vmul.f32 %v1015, %v631
        %v1017 = vmul.f32 %v1014, %v635
        %1018 = vrot.lane.b32.xlu0 %v1000, 15
        %v1019 = vpop.permute.xlu0 %1018
        %1020 = vrot.lane.b32.xlu0 %v1001, 15
        %v1021 = vpop.permute.xlu0 %1020
        %v1022 = vsel %vm644, %v1019, %v1021
        %v1023 = vsel %vm644, %v1021, %v1019
        %v1024 = vmul.f32 %v1023, %v651
        %v1025 = vmul.f32 %v1022, %v655
        %1026 = vrot.lane.b32.xlu0 %v1000, 1
        %v1027 = vpop.permute.xlu0 %1026
        %1028 = vrot.lane.b32.xlu0 %v1001, 1
        %v1029 = vpop.permute.xlu0 %1028
        %v1030 = vsel %vm664, %v1027, %v1029
        %v1031 = vsel %vm664, %v1029, %v1027
        %v1032 = vmul.f32 %v1031, %v671
        %v1033 = vmul.f32 %v1030, %v675
        %1034 = vrot.lane.b32.xlu0 %v1000, 127
        %v1035 = vpop.permute.xlu0 %1034
        %1036 = vrot.lane.b32.xlu0 %v1001, 127
        %v1037 = vpop.permute.xlu0 %1036
        %v1038 = vsel %vm684, %v1035, %v1037
        %v1039 = vsel %vm684, %v1037, %v1035
        %v1040 = vmul.f32 %v1038, %v691
        %v1041 = vmul.f32 %v1039, %v695
        %1042 = vrot.lane.b32.xlu0 %v1000, 113
        %v1043 = vpop.permute.xlu0 %1042
        %1044 = vrot.lane.b32.xlu0 %v1001, 113
        %v1045 = vpop.permute.xlu0 %1044
        %v1046 = vsel %vm704, %v1043, %v1045
        %v1047 = vsel %vm704, %v1045, %v1043
        %v1048 = vmul.f32 %v1046, %v711
        %v1049 = vmul.f32 %v1047, %v715
        %1050 = vrot.lane.b32.xlu0 %v1000, 112
        %v1051 = vpop.permute.xlu0 %1050
        %1052 = vrot.lane.b32.xlu0 %v1001, 112
        %v1053 = vpop.permute.xlu0 %1052
        %v1054 = vsel %vm724, %v1051, %v1053
        %v1055 = vsel %vm724, %v1053, %v1051
        %v1056 = vmul.f32 %v1054, %v731
        %v1057 = vmul.f32 %v1055, %v735
        %1058 = vrot.lane.b32.xlu0 %v1000, 111
        %v1059 = vpop.permute.xlu0 %1058
        %1060 = vrot.lane.b32.xlu0 %v1001, 111
        %v1061 = vpop.permute.xlu0 %1060
        %v1062 = vsel %vm744, %v1059, %v1061
        %v1063 = vsel %vm744, %v1061, %v1059
        %v1064 = vmul.f32 %v1062, %v751
        %v1065 = vmul.f32 %v1063, %v755
        %v1066 = vpack.c.bf16 %v1016, %v1008
        %v1067 = vpack.c.bf16 %v1017, %v1009
        %v1068 = vpack.c.bf16 %v1032, %v1024
        %v1069 = vpack.c.bf16 %v1033, %v1025
        %v1070 = vpack.c.bf16 %v1040, %v1000
        %v1071 = vpack.c.bf16 %v1041, %v1001
        %v1072 = vpack.c.bf16 %v1056, %v1048
        %v1073 = vpack.c.bf16 %v1057, %v1049
        %v1074 = vpack.c.bf16 %v1064, %v1064
        %v1075 = vpack.c.bf16 %v1065, %v1065
        %s1076 = scalar_lea.vmem [#allocation8], 8
        %v1077 = vld [vmem:[%s1076] sm:$0xf]
        %v1079 = vsel %vm771, %v1077, 0
        %v1082 = vsel %vm775, %v1074, 0
        %v1085 = vsel %vm775, %v1075, 0
        %1087 = vmatprep.subr.bf16.mxu0 %v1067
        %1088 = vmatpush1.bf16.msra.mxu0 %v1066
        %1089 = vmatprep.subr.bf16.mxu0 %v1069
        %1090 = vmatpush1.bf16.msra.mxu0 %v1068
        %1091 = vmatprep.subr.bf16.mxu0 %v1071
        %1092 = vmatpush1.bf16.msra.mxu0 %v1070
        %1093 = vmatprep.subr.bf16.mxu0 %v1073
        %1094 = vmatpush1.bf16.msra.mxu0 %v1072
        %1095 = vmatprep.subr.bf16.mxu0 %v1085
        %1096 = vmatpush1.bf16.msra.mxu0 %v1082
        %1097 = vmatprep.subr.bf16.mxu0 0
        %1098 = vmatpush1.bf16.msra.mxu0 0
        %1099 = vmatprep.subr.bf16.mxu0 0
        %1100 = vmatpush1.bf16.msra.mxu0 0
        %1101 = vmatprep.subr.bf16.mxu0 0
        %1102 = vmatpush1.bf16.msra.mxu0 0
        %1103 = vmatprep.subr.bf16.mxu0 0
        %1104 = vmatpush1.bf16.msra.mxu0 0
        %1105 = vmatprep.subr.bf16.mxu0 0
        %1106 = vmatpush1.bf16.msra.mxu0 0
        %1107 = vmatprep.subr.bf16.mxu0 0
        %1108 = vmatpush1.bf16.msra.mxu0 0
        %1109 = vmatprep.subr.bf16.mxu0 0
        %1110 = vmatpush1.bf16.msra.mxu0 0
        %1111 = vmatprep.subr.bf16.mxu0 0
        %1112 = vmatpush1.bf16.msra.mxu0 0
        %1113 = vmatprep.subr.bf16.mxu0 0
        %1114 = vmatpush1.bf16.msra.mxu0 0
        %1115 = vmatprep.subr.bf16.mxu0 0
        %1116 = vmatpush1.bf16.msra.mxu0 0
        %1117 = vmatprep.subr.bf16.mxu0 0
        %1118 = vmatpush1.bf16.msra.mxu0 0
        %1119 = vmatprep.mubr.bf16.mxu0 0
        %1120 = vmatmul.mubr.bf16.gmra.mrb[0].mxu0 %v1079
        %v1121 = vpop.f32.mrb[0].mxu0
        %v1122 = vadd.f32 0.0, %v1121
        %v1123 = vpop.f32.mrb[0].mxu0
        %v1124 = vadd.f32 0.0, %v1123
        %v1125 = vpop.f32.mrb[0].mxu0
        %v1126 = vpop.f32.mrb[0].mxu0
        %1127 = vdwg.mxu0
        %s1128 = scalar_lea.vmem [#allocation10], 16
        %v1129 = vld [vmem:[%s1128] sm:$0xff]
        %1131 = vset.pattern.permute.xlu0 0
        %1132 = vperm.xlu0 %1131, %v1129
        %v1133 = vpop.permute.xlu0 %1132
        %v1135 = vmul.f32 %v1122, %v1133
        %v1136 = vmul.f32 %v1124, %v1133
        %1137 = vset.pattern.permute.xlu0 1
        %1138 = vperm.xlu0 %1137, %v1129
        %v1139 = vpop.permute.xlu0 %1138
        %v1141 = vadd.f32 %v1135, %v1139
        %v1142 = vadd.f32 %v1136, %v1139
        %v1143 = vsub.f32 0.0, %v1141
        %v1144 = vsub.f32 0.0, %v1142
        %v1145 = vmul.f32 %v1143, 1.442695
        %v1146 = vpow.pop %v1145
        %v1147 = vmul.f32 %v1144, 1.442695
        %v1148 = vpow.pop %v1147
        %v1149 = vadd.f32 %v1146, 1.0
        %v1150 = vadd.f32 %v1148, 1.0
        %v1151 = vrcp.pop %v1149
        %v1152 = vrcp.pop %v1150
        %v1153 = vmul.f32 %v1141, %v1151
        %v1154 = vmul.f32 %v1142, %v1152
        %1155 = vrot.lane.b32.xlu0 %v1153, 17
        %v1156 = vpop.permute.xlu0 %1155
        %1157 = vrot.lane.b32.xlu0 %v1154, 17
        %v1158 = vpop.permute.xlu0 %1157
        %v1159 = vsel %vm604, %v1156, %v1158
        %v1160 = vsel %vm604, %v1158, %v1156
        %v1161 = vmul.f32 %v1160, %v611
        %v1162 = vmul.f32 %v1159, %v615
        %1163 = vrot.lane.b32.xlu0 %v1153, 16
        %v1164 = vpop.permute.xlu0 %1163
        %1165 = vrot.lane.b32.xlu0 %v1154, 16
        %v1166 = vpop.permute.xlu0 %1165
        %v1167 = vsel %vm624, %v1164, %v1166
        %v1168 = vsel %vm624, %v1166, %v1164
        %v1169 = vmul.f32 %v1168, %v631
        %v1170 = vmul.f32 %v1167, %v635
        %1171 = vrot.lane.b32.xlu0 %v1153, 15
        %v1172 = vpop.permute.xlu0 %1171
        %1173 = vrot.lane.b32.xlu0 %v1154, 15
        %v1174 = vpop.permute.xlu0 %1173
        %v1175 = vsel %vm644, %v1172, %v1174
        %v1176 = vsel %vm644, %v1174, %v1172
        %v1177 = vmul.f32 %v1176, %v651
        %v1178 = vmul.f32 %v1175, %v655
        %1179 = vrot.lane.b32.xlu0 %v1153, 1
        %v1180 = vpop.permute.xlu0 %1179
        %1181 = vrot.lane.b32.xlu0 %v1154, 1
        %v1182 = vpop.permute.xlu0 %1181
        %v1183 = vsel %vm664, %v1180, %v1182
        %v1184 = vsel %vm664, %v1182, %v1180
        %v1185 = vmul.f32 %v1184, %v671
        %v1186 = vmul.f32 %v1183, %v675
        %1187 = vrot.lane.b32.xlu0 %v1153, 127
        %v1188 = vpop.permute.xlu0 %1187
        %1189 = vrot.lane.b32.xlu0 %v1154, 127
        %v1190 = vpop.permute.xlu0 %1189
        %v1191 = vsel %vm684, %v1188, %v1190
        %v1192 = vsel %vm684, %v1190, %v1188
        %v1193 = vmul.f32 %v1191, %v691
        %v1194 = vmul.f32 %v1192, %v695
        %1195 = vrot.lane.b32.xlu0 %v1153, 113
        %v1196 = vpop.permute.xlu0 %1195
        %1197 = vrot.lane.b32.xlu0 %v1154, 113
        %v1198 = vpop.permute.xlu0 %1197
        %v1199 = vsel %vm704, %v1196, %v1198
        %v1200 = vsel %vm704, %v1198, %v1196
        %v1201 = vmul.f32 %v1199, %v711
        %v1202 = vmul.f32 %v1200, %v715
        %1203 = vrot.lane.b32.xlu0 %v1153, 112
        %v1204 = vpop.permute.xlu0 %1203
        %1205 = vrot.lane.b32.xlu0 %v1154, 112
        %v1206 = vpop.permute.xlu0 %1205
        %v1207 = vsel %vm724, %v1204, %v1206
        %v1208 = vsel %vm724, %v1206, %v1204
        %v1209 = vmul.f32 %v1207, %v731
        %v1210 = vmul.f32 %v1208, %v735
        %1211 = vrot.lane.b32.xlu0 %v1153, 111
        %v1212 = vpop.permute.xlu0 %1211
        %1213 = vrot.lane.b32.xlu0 %v1154, 111
        %v1214 = vpop.permute.xlu0 %1213
        %v1215 = vsel %vm744, %v1212, %v1214
        %v1216 = vsel %vm744, %v1214, %v1212
        %v1217 = vmul.f32 %v1215, %v751
        %v1218 = vmul.f32 %v1216, %v755
        %v1219 = vpack.c.bf16 %v1169, %v1161
        %v1220 = vpack.c.bf16 %v1170, %v1162
        %v1221 = vpack.c.bf16 %v1185, %v1177
        %v1222 = vpack.c.bf16 %v1186, %v1178
        %v1223 = vpack.c.bf16 %v1193, %v1153
        %v1224 = vpack.c.bf16 %v1194, %v1154
        %v1225 = vpack.c.bf16 %v1209, %v1201
        %v1226 = vpack.c.bf16 %v1210, %v1202
        %v1227 = vpack.c.bf16 %v1217, %v1217
        %v1228 = vpack.c.bf16 %v1218, %v1218
        %s1229 = scalar_lea.vmem [#allocation8], 12
        %v1230 = vld [vmem:[%s1229] sm:$0xf]
        %v1232 = vsel %vm771, %v1230, 0
        %v1235 = vsel %vm775, %v1227, 0
        %v1238 = vsel %vm775, %v1228, 0
        %1240 = vmatprep.subr.bf16.mxu0 %v1220
        %1241 = vmatpush1.bf16.msra.mxu0 %v1219
        %1242 = vmatprep.subr.bf16.mxu0 %v1222
        %1243 = vmatpush1.bf16.msra.mxu0 %v1221
        %1244 = vmatprep.subr.bf16.mxu0 %v1224
        %1245 = vmatpush1.bf16.msra.mxu0 %v1223
        %1246 = vmatprep.subr.bf16.mxu0 %v1226
        %1247 = vmatpush1.bf16.msra.mxu0 %v1225
        %1248 = vmatprep.subr.bf16.mxu0 %v1238
        %1249 = vmatpush1.bf16.msra.mxu0 %v1235
        %1250 = vmatprep.subr.bf16.mxu0 0
        %1251 = vmatpush1.bf16.msra.mxu0 0
        %1252 = vmatprep.subr.bf16.mxu0 0
        %1253 = vmatpush1.bf16.msra.mxu0 0
        %1254 = vmatprep.subr.bf16.mxu0 0
        %1255 = vmatpush1.bf16.msra.mxu0 0
        %1256 = vmatprep.subr.bf16.mxu0 0
        %1257 = vmatpush1.bf16.msra.mxu0 0
        %1258 = vmatprep.subr.bf16.mxu0 0
        %1259 = vmatpush1.bf16.msra.mxu0 0
        %1260 = vmatprep.subr.bf16.mxu0 0
        %1261 = vmatpush1.bf16.msra.mxu0 0
        %1262 = vmatprep.subr.bf16.mxu0 0
        %1263 = vmatpush1.bf16.msra.mxu0 0
        %1264 = vmatprep.subr.bf16.mxu0 0
        %1265 = vmatpush1.bf16.msra.mxu0 0
        %1266 = vmatprep.subr.bf16.mxu0 0
        %1267 = vmatpush1.bf16.msra.mxu0 0
        %1268 = vmatprep.subr.bf16.mxu0 0
        %1269 = vmatpush1.bf16.msra.mxu0 0
        %1270 = vmatprep.subr.bf16.mxu0 0
        %1271 = vmatpush1.bf16.msra.mxu0 0
        %1272 = vmatprep.mubr.bf16.mxu0 0
        %1273 = vmatmul.mubr.bf16.gmra.mrb[0].mxu0 %v1232
        %v1274 = vpop.f32.mrb[0].mxu0
        %v1275 = vadd.f32 0.0, %v1274
        %v1276 = vpop.f32.mrb[0].mxu0
        %v1277 = vadd.f32 0.0, %v1276
        %v1278 = vpop.f32.mrb[0].mxu0
        %v1279 = vpop.f32.mrb[0].mxu0
        %1280 = vdwg.mxu0
        %s1281 = scalar_lea.vmem [#allocation10], 24
        %v1282 = vld [vmem:[%s1281] sm:$0xff]
        %1284 = vset.pattern.permute.xlu0 0
        %1285 = vperm.xlu0 %1284, %v1282
        %v1286 = vpop.permute.xlu0 %1285
        %v1288 = vmul.f32 %v1275, %v1286
        %v1289 = vmul.f32 %v1277, %v1286
        %1290 = vset.pattern.permute.xlu0 1
        %1291 = vperm.xlu0 %1290, %v1282
        %v1292 = vpop.permute.xlu0 %1291
        %v1294 = vadd.f32 %v1288, %v1292
        %v1295 = vadd.f32 %v1289, %v1292
        %v1296 = vsub.f32 0.0, %v1294
        %v1297 = vsub.f32 0.0, %v1295
        %v1298 = vmul.f32 %v1296, 1.442695
        %v1299 = vpow.pop %v1298
        %v1300 = vmul.f32 %v1297, 1.442695
        %v1301 = vpow.pop %v1300
        %v1302 = vadd.f32 %v1299, 1.0
        %v1303 = vadd.f32 %v1301, 1.0
        %v1304 = vrcp.pop %v1302
        %v1305 = vrcp.pop %v1303
        %v1306 = vmul.f32 %v1294, %v1304
        %v1307 = vmul.f32 %v1295, %v1305
        %v1308 = vpack.c.bf16 %v581, %v508
        %v1309 = vpack.c.bf16 %v582, %v509
        %v1310 = vpack.c.bf16 %v1000, %v847
        %v1311 = vpack.c.bf16 %v1001, %v848
        %v1312 = vpack.c.bf16 %v1306, %v1153
        %v1313 = vpack.c.bf16 %v1307, %v1154
        %v1314 = vld [vmem:[#allocation11] sm:$0xf]
        %vm1315 = vcmask 392192
        %v1317 = vsel %vm1315, %v1314, 0
        %1319 = vmatprep.subr.bf16.mxu0 %v1309
        %1320 = vmatpush1.bf16.msra.mxu0 %v1308
        %1321 = vmatprep.subr.bf16.mxu0 %v1311
        %1322 = vmatpush1.bf16.msra.mxu0 %v1310
        %1323 = vmatprep.subr.bf16.mxu0 %v1313
        %1324 = vmatpush1.bf16.msra.mxu0 %v1312
        %1325 = vmatprep.subr.bf16.mxu0 0
        %1326 = vmatpush1.bf16.msra.mxu0 0
        %1327 = vmatprep.subr.bf16.mxu0 0
        %1328 = vmatpush1.bf16.msra.mxu0 0
        %1329 = vmatprep.subr.bf16.mxu0 0
        %1330 = vmatpush1.bf16.msra.mxu0 0
        %1331 = vmatprep.subr.bf16.mxu0 0
        %1332 = vmatpush1.bf16.msra.mxu0 0
        %1333 = vmatprep.subr.bf16.mxu0 0
        %1334 = vmatpush1.bf16.msra.mxu0 0
        %1335 = vmatprep.subr.bf16.mxu0 0
        %1336 = vmatpush1.bf16.msra.mxu0 0
        %1337 = vmatprep.subr.bf16.mxu0 0
        %1338 = vmatpush1.bf16.msra.mxu0 0
        %1339 = vmatprep.subr.bf16.mxu0 0
        %1340 = vmatpush1.bf16.msra.mxu0 0
        %1341 = vmatprep.subr.bf16.mxu0 0
        %1342 = vmatpush1.bf16.msra.mxu0 0
        %1343 = vmatprep.subr.bf16.mxu0 0
        %1344 = vmatpush1.bf16.msra.mxu0 0
        %1345 = vmatprep.subr.bf16.mxu0 0
        %1346 = vmatpush1.bf16.msra.mxu0 0
        %1347 = vmatprep.subr.bf16.mxu0 0
        %1348 = vmatpush1.bf16.msra.mxu0 0
        %1349 = vmatprep.subr.bf16.mxu0 0
        %1350 = vmatpush1.bf16.msra.mxu0 0
        %1351 = vmatprep.mubr.bf16.mxu0 0
        %1352 = vmatmul.mubr.bf16.gmra.mrb[0].mxu0 %v1317
        %v1353 = vpop.f32.mrb[0].mxu0
        %v1354 = vadd.f32 0.0, %v1353
        %v1355 = vpop.f32.mrb[0].mxu0
        %v1356 = vadd.f32 0.0, %v1355
        %v1357 = vpop.f32.mrb[0].mxu0
        %v1358 = vpop.f32.mrb[0].mxu0
        %1359 = vdwg.mxu0
        %v1360 = vld [vmem:[#allocation13] sm:$0xff]
        %1362 = vset.pattern.permute.xlu0 0
        %1363 = vperm.xlu0 %1362, %v1360
        %v1364 = vpop.permute.xlu0 %1363
        %v1366 = vmul.f32 %v1354, %v1364
        %v1367 = vmul.f32 %v1356, %v1364
        %1368 = vset.pattern.permute.xlu0 1
        %1369 = vperm.xlu0 %1368, %v1360
        %v1370 = vpop.permute.xlu0 %1369
        %v1372 = vadd.f32 %v1366, %v1370
        %v1373 = vadd.f32 %v1367, %v1370
        %v1374 = vsub.f32 0.0, %v1372
        %v1375 = vsub.f32 0.0, %v1373
        %v1376 = vmul.f32 %v1374, 1.442695
        %v1377 = vpow.pop %v1376
        %v1378 = vmul.f32 %v1375, 1.442695
        %v1379 = vpow.pop %v1378
        %v1380 = vadd.f32 %v1377, 1.0
        %v1381 = vadd.f32 %v1379, 1.0
        %v1382 = vrcp.pop %v1380
        %v1383 = vrcp.pop %v1381
        %v1384 = vmul.f32 %v1372, %v1382
        %v1385 = vmul.f32 %v1373, %v1383
        %1386 = vst [vmem:[%s419] sm:$0xff] %v1384
        %1387 = vst [vmem:[%s419 + $0x8] sm:$0xff] %v1385
        %s1388 = sand.u32 %s210, 1
        %s1389 = scalar_lea.sflag [#allocation4], %s1388
        %s1390 = sand.u32 %s210, 1
        %s1391 = smul.addr %s1390, 16
        %s1392 = scalar_lea.vmem [#allocation16], %s1391
        // Predicated region
        $region85: #{tpu_custom_call.1} parent=51 // pred_check
          %p1393 = pneg %p220
        $region86: #{tpu_custom_call.1} parent=51 // pred_check_branch
          %1395 = sbr.rel (%p1393) target = $region88
        $region87: #{tpu_custom_call.1} parent=51 // pred_region
          %s1397 = ssub.s32 256, 256
          %1398 = vsyncadd %s1389, %s1397
          %s1399 = smul.addr %s29, 2
          %s1400 = smul.addr %s1399, 128
          %s1401 = scalar_lea.hbm %s8, %s1400
          %s1403 = sshll.u32 %s1392, 4
          %s1404 = int_to_ptr.vmem [resolvable:$true] %s1403
          %1406 = dma.vmem_to_hbm [thread:$0]  %s1404, 256, %s1401, %s1389
        $region88: #{tpu_custom_call.1} parent=51 // pred_fallthru
          _
      $region52: #{tpu_custom_call.1} parent=5 // pred_fallthru
        _
      %p1407 = scmp.le.s32.totalorder 2, %s24
      // Predicated region
      $region89: #{tpu_custom_call.1} parent=5 // pred_check
        %p1408 = pneg %p1407
      $region90: #{tpu_custom_call.1} parent=5 // pred_check_branch
        %1410 = sbr.rel (%p1408) target = $region92
      $region91: #{tpu_custom_call.1} parent=5 // pred_region
        %s1411 = ssub.s32 %s24, 2
        // Predicated region
        $region93: #{tpu_custom_call.1} parent=91 // pred_check
          %p1412 = pneg %p226
        $region94: #{tpu_custom_call.1} parent=91 // pred_check_branch
          %1414 = sbr.rel (%p1412) target = $region96
        $region95: #{tpu_custom_call.1} parent=91 // pred_region
          %s1415 = sand.u32 %s211, 1
          %s1416 = scalar_lea.sflag [#allocation4], %s1415
          %s1417 = sand.u32 %s211, 1
          %s1418 = smul.addr %s1417, 16
          %s1419 = scalar_lea.vmem [#allocation16], %s1418
          %1420 = dma.done %s1416, 256
        $region96: #{tpu_custom_call.1} parent=91 // pred_fallthru
          _
      $region92: #{tpu_custom_call.1} parent=5 // pred_fallthru
        _
    $region6: #{tpu_custom_call.1} parent=1 // loop_footer
      %s28 = sadd.s32 1, %s24
    $region7: #{tpu_custom_call.1} parent=1 // loop_footer_branch
      %23 = sbr.rel target = $region3
    $region8: #{tpu_custom_call.1} parent=1 // loop_exit
      _
    %1421 = vsyncpa [#allocation3], 1
    %s1422 = scalar_lea.sflag [#allocation3], 1
    %1423 = vsyncpa %s1422, 1
    %1424 = vsyncpa [#allocation6], 1
    %1425 = vsyncpa [#allocation9], 1
    %1426 = vsyncpa [#allocation12], 1
    %1427 = vsyncpa [#allocation15], 1
    %1428 = vsyncpa [#allocation4], 1
    %s1429 = scalar_lea.sflag [#allocation4], 1
    %1430 = vsyncpa %s1429, 1

</llo_original>
